<compile_context>
chip_gen: v6e
topology: v6e:2x2x1
jax: 0.10.0
libtpu: 0.0.40
codegen_flags: <defaults>
</compile_context>

<pallas_src>
import jax
import jax.numpy as jnp
from jax.experimental import pallas as pl
from jax.experimental.pallas import tpu as pltpu

BN_EPS = 1e-5           # PyTorch BatchNorm2d default
USE_BF16_MXU = False    # bf16 operands for the conv matmuls only (worth enabling on
                        # v6e/v7x once K >= 128); BN statistics always stay f32.
                        # If enabled, relax the max-error tolerance accordingly.


def _band_conv_weights(w_hwio, W):
    """Fold the W-direction 3-tap conv (and its zero padding) into a block-banded matrix.

    w_hwio: (3, 3, Cin, Cout). Returns (3, W*Cin, W*Cout) where band[dy] maps the packed
    activation row at image row h+dy-1 (lanes = w*Cin + ci) to packed outputs
    (lanes = w*Cout + co). Out-of-range w taps are simply absent -> zero padding.
    """
    Cin, Cout = int(w_hwio.shape[2]), int(w_hwio.shape[3])
    wp = jnp.arange(W)[:, None]          # source (input) w index
    wo = jnp.arange(W)[None, :]          # output w index
    bands = []
    for dy in range(3):
        acc = jnp.zeros((W, Cin, W, Cout), jnp.float32)
        for dx in range(3):
            sel = (wp == wo + dx - 1).astype(jnp.float32)              # (W, W)
            acc = acc + sel[:, None, :, None] * w_hwio[dy, dx][None, :, None, :]
        bands.append(acc.reshape(W * Cin, W * Cout))
    return jnp.stack(bands, axis=0)


def _make_kernel(N, H, W):
    R = N * H
    inv_m = 1.0 / float(N * H * W)

    def kernel(x_ref, w1_ref, b1_ref, g1_ref, be1_ref,
               w2_ref, b2_ref, g2_ref, be2_ref, proj_ref, o_ref):
        proj = proj_ref[...]                         # (W*Cout, W*Cout) 0/1 projector

        def dot_f32(a, b):
            return jnp.dot(a, b, preferred_element_type=jnp.float32)

        def dot_mxu(a, b):
            # Conv matmuls only; BN statistics always stay in f32.
            if USE_BF16_MXU:
                a = a.astype(jnp.bfloat16)
                b = b.astype(jnp.bfloat16)
            return jnp.dot(a, b, preferred_element_type=jnp.float32)

        def h_shift(a, direction):
            """Rows shifted by +-1 in H (sublane roll) with zeroed rows at image borders."""
            K = a.shape[1]
            # Per-packed-row h index, built batch-aware (no vector integer % needed).
            h_idx = jax.lax.broadcasted_iota(jnp.int32, (N, H, K), 1).reshape(R, K)
            if direction == -1:                      # source row h-1, zero where h == 0
                rolled = pltpu.roll(a, 1, axis=0)
                return jnp.where(h_idx == 0, 0.0, rolled)
            else:                                    # source row h+1, zero where h == H-1
                rolled = pltpu.roll(a, R - 1, axis=0)
                return jnp.where(h_idx == H - 1, 0.0, rolled)

        def conv_relu_bn(a, w_ref, b_row, g_row, be_row):
            # 3x3 conv, padding=1: W taps + W zero-padding are pre-folded into the banded
            # weights; H taps are the three row-shifted operands below.
            acc = dot_mxu(a, w_ref[1])                         # kernel row dy=1 (center)
            acc = acc + dot_mxu(h_shift(a, -1), w_ref[0])      # dy=0, reads image row h-1
            acc = acc + dot_mxu(h_shift(a, +1), w_ref[2])      # dy=2, reads image row h+1
            acc = jnp.maximum(acc + b_row, 0.0)                # conv bias + ReLU
            # BatchNorm2d, train-mode biased batch stats over (N,H,W). Two-pass centered
            # variance (robust vs E[x^2]-E[x]^2); the per-channel reduce over w and the
            # broadcast back across w happen in one MXU matmul against `proj`.
            mean = jnp.sum(dot_f32(acc, proj), axis=0, keepdims=True) * inv_m
            centered = acc - mean
            var = jnp.sum(dot_f32(centered * centered, proj), axis=0, keepdims=True) * inv_m
            scale = jax.lax.rsqrt(var + BN_EPS) * g_row
            return centered * scale + be_row                   # (R, W*Cout), lane-dense

        y1 = conv_relu_bn(x_ref[...], w1_ref, b1_ref[...], g1_ref[...], be1_ref[...])
        # Block-1 output never leaves VMEM/vregs; block 2 consumes it directly.
        y2 = conv_relu_bn(y1, w2_ref, b2_ref[...], g2_ref[...], be2_ref[...])
        o_ref[...] = y2                                        # full-width (lane-dense) store

    return kernel


def double_conv_block(x_nchw, params):
    """DoubleConvBlock.forward (two ConvBlocks) as ONE fused Pallas kernel. NCHW in/out."""
    N, Cin, H, W = x_nchw.shape
    p1, p2 = params
    Cout = int(p1["w"].shape[-1])
    R = N * H

    # NCHW -> NHWC -> lane-packed (N*H, W*C) slab (channels + width share the lane axis).
    # These wrapper transposes are the NCHW API cost; a NHWC-native model could drop them.
    x_packed = jnp.transpose(x_nchw, (0, 2, 3, 1)).reshape(R, W * Cin).astype(jnp.float32)

    w1 = _band_conv_weights(p1["w"], W)                         # (3, W*Cin,  W*Cout)
    w2 = _band_conv_weights(p2["w"], W)                         # (3, W*Cout, W*Cout)
    tile_row = lambda v: jnp.tile(v.astype(jnp.float32), W)[None, :]   # (1, W*Cout)
    # proj[w*Cout+c, w'*Cout+c'] = (c == c'): sums a packed row over w per channel and
    # broadcasts the result back to every w position -- one 128x128 MXU matmul.
    proj = jnp.kron(jnp.ones((W, W), jnp.float32), jnp.eye(Cout, dtype=jnp.float32))

    out_packed = pl.pallas_call(
        _make_kernel(N, H, W),
        out_shape=jax.ShapeDtypeStruct((R, W * Cout), jnp.float32),
        in_specs=[pl.BlockSpec(memory_space=pltpu.MemorySpace.VMEM)] * 10,
        out_specs=pl.BlockSpec(memory_space=pltpu.MemorySpace.VMEM),
        # Tiny footprint at these shapes; re-derive (<= ~48-56 MiB) for the gridded v7x
        # version, or raise toward 64-100 MiB on v5e/v6e for bigger whole-tensor tiles.
        compiler_params=pltpu.CompilerParams(vmem_limit_bytes=32 * 1024 * 1024),
    )(x_packed,
      w1, tile_row(p1["b"]), tile_row(p1["gamma"]), tile_row(p1["beta"]),
      w2, tile_row(p2["b"]), tile_row(p2["gamma"]), tile_row(p2["beta"]),
      proj)

    # Packed (N*H, W*Cout) slab -> NCHW (pure layout plumbing, outside the kernel).
    return jnp.transpose(out_packed.reshape(N, H, W, Cout), (0, 3, 1, 2))


# ---- pure-JAX reference (correctness check only) ----
def _conv_block_ref(x_nhwc, w, b, gamma, beta):
    y = jax.lax.conv_general_dilated(
        x_nhwc, w, window_strides=(1, 1), padding="SAME",
        dimension_numbers=("NHWC", "HWIO", "NHWC"))
    y = y + b
    y = jnp.maximum(y, 0.0)
    mean = jnp.mean(y, axis=(0, 1, 2), keepdims=True)
    var = jnp.mean((y - mean) ** 2, axis=(0, 1, 2), keepdims=True)
    return (y - mean) * jax.lax.rsqrt(var + BN_EPS) * gamma + beta


if __name__ == "__main__":
    key = jax.random.PRNGKey(0)
    N, Cin, H, W = 2, 4, 16, 16
    Cout = 8

    keys = iter(jax.random.split(key, 10))
    x = jax.random.normal(next(keys), (N, Cin, H, W), jnp.float32)

    # Deterministic synthetic parameters (non-trivial BN affine to exercise that path).
    params = []
    cin = Cin
    for _ in range(2):                                   # two ConvBlocks, both -> Cout
        params.append(dict(
            w=jax.random.normal(next(keys), (3, 3, cin, Cout), jnp.float32) * 0.1,
            b=jax.random.normal(next(keys), (Cout,), jnp.float32) * 0.1,
            gamma=1.0 + 0.1 * jax.random.normal(next(keys), (Cout,), jnp.float32),
            beta=0.1 * jax.random.normal(next(keys), (Cout,), jnp.float32)))
        cin = Cout

    out = jax.block_until_ready(jax.jit(double_conv_block)(x, params))

    # Verify against a plain-JAX reference (no silent fallback paths).
    xr = jnp.transpose(x, (0, 2, 3, 1))
    for p in params:
        xr = _conv_block_ref(xr, p["w"], p["b"], p["gamma"], p["beta"])
    ref = jnp.transpose(xr, (0, 3, 1, 2))

    assert out.shape == (N, Cout, H, W), out.shape
    err = float(jnp.max(jnp.abs(out - ref)))
    assert err < 5e-4, err
    print("KERNEL_OK")
</pallas_src>

<mosaic_0001>
module attributes {stable_mosaic.version = 11 : i64} {
  func.func @kernel(%arg0: memref<32x64xf32, #tpu.memory_space<vmem>>, %arg1: memref<3x64x128xf32, #tpu.memory_space<vmem>>, %arg2: memref<1x128xf32, #tpu.memory_space<vmem>>, %arg3: memref<1x128xf32, #tpu.memory_space<vmem>>, %arg4: memref<1x128xf32, #tpu.memory_space<vmem>>, %arg5: memref<3x128x128xf32, #tpu.memory_space<vmem>>, %arg6: memref<1x128xf32, #tpu.memory_space<vmem>>, %arg7: memref<1x128xf32, #tpu.memory_space<vmem>>, %arg8: memref<1x128xf32, #tpu.memory_space<vmem>>, %arg9: memref<128x128xf32, #tpu.memory_space<vmem>>, %arg10: memref<32x128xf32, #tpu.memory_space<vmem>>) attributes {dimension_semantics = [], scalar_prefetch = 0 : i64, scratch_operands = 0 : i64, tpu.core_type = #tpu.core_type<tc>} {
    %c0 = arith.constant 0 : index
    %c0_0 = arith.constant 0 : index
    %0 = vector.load %arg9[%c0, %c0_0] : memref<128x128xf32, #tpu.memory_space<vmem>>, vector<128x128xf32>
    %c0_1 = arith.constant 0 : index
    %c0_2 = arith.constant 0 : index
    %1 = vector.load %arg0[%c0_1, %c0_2] : memref<32x64xf32, #tpu.memory_space<vmem>>, vector<32x64xf32>
    %c0_3 = arith.constant 0 : index
    %c0_4 = arith.constant 0 : index
    %2 = vector.load %arg2[%c0_3, %c0_4] : memref<1x128xf32, #tpu.memory_space<vmem>>, vector<1x128xf32>
    %c0_5 = arith.constant 0 : index
    %c0_6 = arith.constant 0 : index
    %3 = vector.load %arg3[%c0_5, %c0_6] : memref<1x128xf32, #tpu.memory_space<vmem>>, vector<1x128xf32>
    %c0_7 = arith.constant 0 : index
    %c0_8 = arith.constant 0 : index
    %4 = vector.load %arg4[%c0_7, %c0_8] : memref<1x128xf32, #tpu.memory_space<vmem>>, vector<1x128xf32>
    %c1 = arith.constant 1 : index
    %c0_9 = arith.constant 0 : index
    %c0_10 = arith.constant 0 : index
    %5 = vector.load %arg1[%c1, %c0_9, %c0_10] : memref<3x64x128xf32, #tpu.memory_space<vmem>>, vector<1x64x128xf32>
    %6 = vector.shape_cast %5 : vector<1x64x128xf32> to vector<64x128xf32>
    %cst = arith.constant dense<0.000000e+00> : vector<32x128xf32>
    %7 = tpu.matmul %1, %6, %cst {dimension_numbers = #tpu.dot_dimension_numbers<[1], [0], [0], [1], [0, 0, 1, 1], [], []>} : vector<32x64xf32>, vector<64x128xf32>, vector<32x128xf32> -> vector<32x128xf32>
    %8 = tpu.iota {dimensions = array<i32: 1>} : vector<2x16x64xi32>
    %9 = vector.shape_cast %8 : vector<2x16x64xi32> to vector<32x64xi32>
    %c1_i32 = arith.constant 1 : i32
    %10 = tpu.dynamic_rotate %1 by %c1_i32 dim 0 : vector<32x64xf32>, i32 -> vector<32x64xf32>
    %c0_i32 = arith.constant 0 : i32
    %11 = vector.broadcast %c0_i32 : i32 to vector<32x64xi32>
    %12 = arith.cmpi eq, %9, %11 : vector<32x64xi32>
    %cst_11 = arith.constant 0.000000e+00 : f32
    %13 = vector.broadcast %cst_11 : f32 to vector<32x64xf32>
    %14 = arith.select %12, %13, %10 : vector<32x64xi1>, vector<32x64xf32>
    %c0_12 = arith.constant 0 : index
    %c0_13 = arith.constant 0 : index
    %c0_14 = arith.constant 0 : index
    %15 = vector.load %arg1[%c0_12, %c0_13, %c0_14] : memref<3x64x128xf32, #tpu.memory_space<vmem>>, vector<1x64x128xf32>
    %16 = vector.shape_cast %15 : vector<1x64x128xf32> to vector<64x128xf32>
    %cst_15 = arith.constant dense<0.000000e+00> : vector<32x128xf32>
    %17 = tpu.matmul %14, %16, %cst_15 {dimension_numbers = #tpu.dot_dimension_numbers<[1], [0], [0], [1], [0, 0, 1, 1], [], []>} : vector<32x64xf32>, vector<64x128xf32>, vector<32x128xf32> -> vector<32x128xf32>
    %18 = arith.addf %7, %17 : vector<32x128xf32>
    %19 = tpu.iota {dimensions = array<i32: 1>} : vector<2x16x64xi32>
    %20 = vector.shape_cast %19 : vector<2x16x64xi32> to vector<32x64xi32>
    %c31_i32 = arith.constant 31 : i32
    %21 = tpu.dynamic_rotate %1 by %c31_i32 dim 0 : vector<32x64xf32>, i32 -> vector<32x64xf32>
    %c15_i32 = arith.constant 15 : i32
    %22 = vector.broadcast %c15_i32 : i32 to vector<32x64xi32>
    %23 = arith.cmpi eq, %20, %22 : vector<32x64xi32>
    %cst_16 = arith.constant 0.000000e+00 : f32
    %24 = vector.broadcast %cst_16 : f32 to vector<32x64xf32>
    %25 = arith.select %23, %24, %21 : vector<32x64xi1>, vector<32x64xf32>
    %c2 = arith.constant 2 : index
    %c0_17 = arith.constant 0 : index
    %c0_18 = arith.constant 0 : index
    %26 = vector.load %arg1[%c2, %c0_17, %c0_18] : memref<3x64x128xf32, #tpu.memory_space<vmem>>, vector<1x64x128xf32>
    %27 = vector.shape_cast %26 : vector<1x64x128xf32> to vector<64x128xf32>
    %cst_19 = arith.constant dense<0.000000e+00> : vector<32x128xf32>
    %28 = tpu.matmul %25, %27, %cst_19 {dimension_numbers = #tpu.dot_dimension_numbers<[1], [0], [0], [1], [0, 0, 1, 1], [], []>} : vector<32x64xf32>, vector<64x128xf32>, vector<32x128xf32> -> vector<32x128xf32>
    %29 = arith.addf %18, %28 : vector<32x128xf32>
    %30 = vector.broadcast %2 : vector<1x128xf32> to vector<32x128xf32>
    %31 = arith.addf %29, %30 : vector<32x128xf32>
    %cst_20 = arith.constant 0.000000e+00 : f32
    %32 = vector.broadcast %cst_20 : f32 to vector<32x128xf32>
    %33 = arith.maximumf %31, %32 : vector<32x128xf32>
    %cst_21 = arith.constant dense<0.000000e+00> : vector<32x128xf32>
    %34 = tpu.matmul %33, %0, %cst_21 {dimension_numbers = #tpu.dot_dimension_numbers<[1], [0], [0], [1], [0, 0, 1, 1], [], []>} : vector<32x128xf32>, vector<128x128xf32>, vector<32x128xf32> -> vector<32x128xf32>
    %cst_22 = arith.constant dense<0.000000e+00> : vector<128xf32>
    %35 = vector.multi_reduction <add>, %34, %cst_22 [0] : vector<32x128xf32> to vector<128xf32>
    %36 = vector.shape_cast %35 : vector<128xf32> to vector<1x128xf32>
    %cst_23 = arith.constant 0.001953125 : f32
    %37 = vector.broadcast %cst_23 : f32 to vector<1x128xf32>
    %38 = arith.mulf %36, %37 : vector<1x128xf32>
    %39 = vector.broadcast %38 : vector<1x128xf32> to vector<32x128xf32>
    %40 = arith.subf %33, %39 : vector<32x128xf32>
    %41 = arith.mulf %40, %40 : vector<32x128xf32>
    %cst_24 = arith.constant dense<0.000000e+00> : vector<32x128xf32>
    %42 = tpu.matmul %41, %0, %cst_24 {dimension_numbers = #tpu.dot_dimension_numbers<[1], [0], [0], [1], [0, 0, 1, 1], [], []>} : vector<32x128xf32>, vector<128x128xf32>, vector<32x128xf32> -> vector<32x128xf32>
    %cst_25 = arith.constant dense<0.000000e+00> : vector<128xf32>
    %43 = vector.multi_reduction <add>, %42, %cst_25 [0] : vector<32x128xf32> to vector<128xf32>
    %44 = vector.shape_cast %43 : vector<128xf32> to vector<1x128xf32>
    %cst_26 = arith.constant 0.001953125 : f32
    %45 = vector.broadcast %cst_26 : f32 to vector<1x128xf32>
    %46 = arith.mulf %44, %45 : vector<1x128xf32>
    %cst_27 = arith.constant 9.99999974E-6 : f32
    %47 = vector.broadcast %cst_27 : f32 to vector<1x128xf32>
    %48 = arith.addf %46, %47 : vector<1x128xf32>
    %49 = math.rsqrt %48 : vector<1x128xf32>
    %50 = arith.mulf %49, %3 : vector<1x128xf32>
    %51 = vector.broadcast %50 : vector<1x128xf32> to vector<32x128xf32>
    %52 = arith.mulf %40, %51 : vector<32x128xf32>
    %53 = vector.broadcast %4 : vector<1x128xf32> to vector<32x128xf32>
    %54 = arith.addf %52, %53 : vector<32x128xf32>
    %c0_28 = arith.constant 0 : index
    %c0_29 = arith.constant 0 : index
    %55 = vector.load %arg6[%c0_28, %c0_29] : memref<1x128xf32, #tpu.memory_space<vmem>>, vector<1x128xf32>
    %c0_30 = arith.constant 0 : index
    %c0_31 = arith.constant 0 : index
    %56 = vector.load %arg7[%c0_30, %c0_31] : memref<1x128xf32, #tpu.memory_space<vmem>>, vector<1x128xf32>
    %c0_32 = arith.constant 0 : index
    %c0_33 = arith.constant 0 : index
    %57 = vector.load %arg8[%c0_32, %c0_33] : memref<1x128xf32, #tpu.memory_space<vmem>>, vector<1x128xf32>
    %c1_34 = arith.constant 1 : index
    %c0_35 = arith.constant 0 : index
    %c0_36 = arith.constant 0 : index
    %58 = vector.load %arg5[%c1_34, %c0_35, %c0_36] : memref<3x128x128xf32, #tpu.memory_space<vmem>>, vector<1x128x128xf32>
    %59 = vector.shape_cast %58 : vector<1x128x128xf32> to vector<128x128xf32>
    %cst_37 = arith.constant dense<0.000000e+00> : vector<32x128xf32>
    %60 = tpu.matmul %54, %59, %cst_37 {dimension_numbers = #tpu.dot_dimension_numbers<[1], [0], [0], [1], [0, 0, 1, 1], [], []>} : vector<32x128xf32>, vector<128x128xf32>, vector<32x128xf32> -> vector<32x128xf32>
    %61 = tpu.iota {dimensions = array<i32: 1>} : vector<2x16x128xi32>
    %62 = vector.shape_cast %61 : vector<2x16x128xi32> to vector<32x128xi32>
    %c1_i32_38 = arith.constant 1 : i32
    %63 = tpu.dynamic_rotate %54 by %c1_i32_38 dim 0 : vector<32x128xf32>, i32 -> vector<32x128xf32>
    %c0_i32_39 = arith.constant 0 : i32
    %64 = vector.broadcast %c0_i32_39 : i32 to vector<32x128xi32>
    %65 = arith.cmpi eq, %62, %64 : vector<32x128xi32>
    %cst_40 = arith.constant 0.000000e+00 : f32
    %66 = vector.broadcast %cst_40 : f32 to vector<32x128xf32>
    %67 = arith.select %65, %66, %63 : vector<32x128xi1>, vector<32x128xf32>
    %c0_41 = arith.constant 0 : index
    %c0_42 = arith.constant 0 : index
    %c0_43 = arith.constant 0 : index
    %68 = vector.load %arg5[%c0_41, %c0_42, %c0_43] : memref<3x128x128xf32, #tpu.memory_space<vmem>>, vector<1x128x128xf32>
    %69 = vector.shape_cast %68 : vector<1x128x128xf32> to vector<128x128xf32>
    %cst_44 = arith.constant dense<0.000000e+00> : vector<32x128xf32>
    %70 = tpu.matmul %67, %69, %cst_44 {dimension_numbers = #tpu.dot_dimension_numbers<[1], [0], [0], [1], [0, 0, 1, 1], [], []>} : vector<32x128xf32>, vector<128x128xf32>, vector<32x128xf32> -> vector<32x128xf32>
    %71 = arith.addf %60, %70 : vector<32x128xf32>
    %72 = tpu.iota {dimensions = array<i32: 1>} : vector<2x16x128xi32>
    %73 = vector.shape_cast %72 : vector<2x16x128xi32> to vector<32x128xi32>
    %c31_i32_45 = arith.constant 31 : i32
    %74 = tpu.dynamic_rotate %54 by %c31_i32_45 dim 0 : vector<32x128xf32>, i32 -> vector<32x128xf32>
    %c15_i32_46 = arith.constant 15 : i32
    %75 = vector.broadcast %c15_i32_46 : i32 to vector<32x128xi32>
    %76 = arith.cmpi eq, %73, %75 : vector<32x128xi32>
    %cst_47 = arith.constant 0.000000e+00 : f32
    %77 = vector.broadcast %cst_47 : f32 to vector<32x128xf32>
    %78 = arith.select %76, %77, %74 : vector<32x128xi1>, vector<32x128xf32>
    %c2_48 = arith.constant 2 : index
    %c0_49 = arith.constant 0 : index
    %c0_50 = arith.constant 0 : index
    %79 = vector.load %arg5[%c2_48, %c0_49, %c0_50] : memref<3x128x128xf32, #tpu.memory_space<vmem>>, vector<1x128x128xf32>
    %80 = vector.shape_cast %79 : vector<1x128x128xf32> to vector<128x128xf32>
    %cst_51 = arith.constant dense<0.000000e+00> : vector<32x128xf32>
    %81 = tpu.matmul %78, %80, %cst_51 {dimension_numbers = #tpu.dot_dimension_numbers<[1], [0], [0], [1], [0, 0, 1, 1], [], []>} : vector<32x128xf32>, vector<128x128xf32>, vector<32x128xf32> -> vector<32x128xf32>
    %82 = arith.addf %71, %81 : vector<32x128xf32>
    %83 = vector.broadcast %55 : vector<1x128xf32> to vector<32x128xf32>
    %84 = arith.addf %82, %83 : vector<32x128xf32>
    %cst_52 = arith.constant 0.000000e+00 : f32
    %85 = vector.broadcast %cst_52 : f32 to vector<32x128xf32>
    %86 = arith.maximumf %84, %85 : vector<32x128xf32>
    %cst_53 = arith.constant dense<0.000000e+00> : vector<32x128xf32>
    %87 = tpu.matmul %86, %0, %cst_53 {dimension_numbers = #tpu.dot_dimension_numbers<[1], [0], [0], [1], [0, 0, 1, 1], [], []>} : vector<32x128xf32>, vector<128x128xf32>, vector<32x128xf32> -> vector<32x128xf32>
    %cst_54 = arith.constant dense<0.000000e+00> : vector<128xf32>
    %88 = vector.multi_reduction <add>, %87, %cst_54 [0] : vector<32x128xf32> to vector<128xf32>
    %89 = vector.shape_cast %88 : vector<128xf32> to vector<1x128xf32>
    %cst_55 = arith.constant 0.001953125 : f32
    %90 = vector.broadcast %cst_55 : f32 to vector<1x128xf32>
    %91 = arith.mulf %89, %90 : vector<1x128xf32>
    %92 = vector.broadcast %91 : vector<1x128xf32> to vector<32x128xf32>
    %93 = arith.subf %86, %92 : vector<32x128xf32>
    %94 = arith.mulf %93, %93 : vector<32x128xf32>
    %cst_56 = arith.constant dense<0.000000e+00> : vector<32x128xf32>
    %95 = tpu.matmul %94, %0, %cst_56 {dimension_numbers = #tpu.dot_dimension_numbers<[1], [0], [0], [1], [0, 0, 1, 1], [], []>} : vector<32x128xf32>, vector<128x128xf32>, vector<32x128xf32> -> vector<32x128xf32>
    %cst_57 = arith.constant dense<0.000000e+00> : vector<128xf32>
    %96 = vector.multi_reduction <add>, %95, %cst_57 [0] : vector<32x128xf32> to vector<128xf32>
    %97 = vector.shape_cast %96 : vector<128xf32> to vector<1x128xf32>
    %cst_58 = arith.constant 0.001953125 : f32
    %98 = vector.broadcast %cst_58 : f32 to vector<1x128xf32>
    %99 = arith.mulf %97, %98 : vector<1x128xf32>
    %cst_59 = arith.constant 9.99999974E-6 : f32
    %100 = vector.broadcast %cst_59 : f32 to vector<1x128xf32>
    %101 = arith.addf %99, %100 : vector<1x128xf32>
    %102 = math.rsqrt %101 : vector<1x128xf32>
    %103 = arith.mulf %102, %56 : vector<1x128xf32>
    %104 = vector.broadcast %103 : vector<1x128xf32> to vector<32x128xf32>
    %105 = arith.mulf %93, %104 : vector<32x128xf32>
    %106 = vector.broadcast %57 : vector<1x128xf32> to vector<32x128xf32>
    %107 = arith.addf %105, %106 : vector<32x128xf32>
    %c0_60 = arith.constant 0 : index
    %c0_61 = arith.constant 0 : index
    %108 = vector.load %arg10[%c0_60, %c0_61] : memref<32x128xf32, #tpu.memory_space<vmem>>, vector<32x128xf32>
    tpu.vector_store %arg10[%c0_60, %c0_61], %107 {strides = array<i32>} : memref<32x128xf32, #tpu.memory_space<vmem>>, vector<32x128xf32>,
    return
  }
}

</mosaic_0001>

<llo_original>
// kernel: tile.33
$region0: #{tile.33}
  #allocation0 [shape = 's32[1]{0}', space=sflag, size = 0x4, scoped, tag = 'scoped memory for tile.33']
  %s0 = inlined_call_operand.vmem [shape: f32[8], index: 0, kind: input, shape index: {}]
  %s1 = inlined_call_operand.vmem [shape: f32[16,8], index: 1, kind: output, shape index: {}]
  // Predicated region
  $region2: #{tile.33} parent=0 // pred_check
    _
  $region3: #{tile.33} parent=0 // pred_check_branch
    %3 = sbr.rel (0) target = $region5
  $region4: #{tile.33} parent=0 // pred_region
    _
  $region5: #{tile.33} parent=0 // pred_fallthru
    _
  %v4 = vld [vmem:[%s0] ss:$0 sm:$0xff]
  %5 = vst [vmem:[%s1] sm:$0xff] %v4
  %s6 = scalar_lea.vmem %s1, 8
  %7 = vst [vmem:[%s6] sm:$0xff] %v4

// kernel: tile.34
$region0: #{tile.34}
  %s0 = inlined_call_operand.vmem [shape: f32[16,8], index: 0, kind: input, shape index: {}]
  %s1 = inlined_call_operand.vmem [shape: f32[1,128], index: 1, kind: output, shape index: {}]
  $region1: #{tile.34} parent=0
    #allocation0 [shape = 'u8[4096]{0}', space=vmem, size = 0x1000, scoped, tag = 'scoped mem for output reshape']
    %v2 = vld [vmem:[%s0] sm:$0x1]
    %vm3 = vcmask 64512
    %4 = vst.msk [vmem:[#allocation0] sm:$0x1] %vm3, %v2
    %s5 = scalar_lea.vmem %s0, 15
    %v6 = vld [vmem:[%s5] sm:$0x1]
    %7 = vrot.lane.b32.xlu0 %v6, 120
    %v8 = vpop.permute.xlu0 %7
    %vm9 = vcmask 1048512
    %10 = vst.msk [vmem:[#allocation0] sm:$0x1] %vm9, %v8
    %s11 = scalar_lea.vmem %s0, 14
    %v12 = vld [vmem:[%s11] sm:$0x1]
    %13 = vrot.lane.b32.xlu0 %v12, 112
    %v14 = vpop.permute.xlu0 %13
    %vm15 = vcmask 982912
    %16 = vst.msk [vmem:[#allocation0] sm:$0x1] %vm15, %v14
    %s17 = scalar_lea.vmem %s0, 13
    %v18 = vld [vmem:[%s17] sm:$0x1]
    %19 = vrot.lane.b32.xlu0 %v18, 104
    %v20 = vpop.permute.xlu0 %19
    %vm21 = vcmask 917312
    %22 = vst.msk [vmem:[#allocation0] sm:$0x1] %vm21, %v20
    %s23 = scalar_lea.vmem %s0, 12
    %v24 = vld [vmem:[%s23] sm:$0x1]
    %25 = vrot.lane.b32.xlu0 %v24, 96
    %v26 = vpop.permute.xlu0 %25
    %vm27 = vcmask 851712
    %28 = vst.msk [vmem:[#allocation0] sm:$0x1] %vm27, %v26
    %s29 = scalar_lea.vmem %s0, 11
    %v30 = vld [vmem:[%s29] sm:$0x1]
    %31 = vrot.lane.b32.xlu0 %v30, 88
    %v32 = vpop.permute.xlu0 %31
    %vm33 = vcmask 786112
    %34 = vst.msk [vmem:[#allocation0] sm:$0x1] %vm33, %v32
    %s35 = scalar_lea.vmem %s0, 10
    %v36 = vld [vmem:[%s35] sm:$0x1]
    %37 = vrot.lane.b32.xlu0 %v36, 80
    %v38 = vpop.permute.xlu0 %37
    %vm39 = vcmask 720512
    %40 = vst.msk [vmem:[#allocation0] sm:$0x1] %vm39, %v38
    %s41 = scalar_lea.vmem %s0, 9
    %v42 = vld [vmem:[%s41] sm:$0x1]
    %43 = vrot.lane.b32.xlu0 %v42, 72
    %v44 = vpop.permute.xlu0 %43
    %vm45 = vcmask 654912
    %46 = vst.msk [vmem:[#allocation0] sm:$0x1] %vm45, %v44
    %s47 = scalar_lea.vmem %s0, 8
    %v48 = vld [vmem:[%s47] sm:$0x1]
    %49 = vrot.lane.b32.xlu0 %v48, 64
    %v50 = vpop.permute.xlu0 %49
    %vm51 = vcmask 589312
    %52 = vst.msk [vmem:[#allocation0] sm:$0x1] %vm51, %v50
    %s53 = scalar_lea.vmem %s0, 7
    %v54 = vld [vmem:[%s53] sm:$0x1]
    %55 = vrot.lane.b32.xlu0 %v54, 56
    %v56 = vpop.permute.xlu0 %55
    %vm57 = vcmask 523712
    %58 = vst.msk [vmem:[#allocation0] sm:$0x1] %vm57, %v56
    %s59 = scalar_lea.vmem %s0, 6
    %v60 = vld [vmem:[%s59] sm:$0x1]
    %61 = vrot.lane.b32.xlu0 %v60, 48
    %v62 = vpop.permute.xlu0 %61
    %vm63 = vcmask 458112
    %64 = vst.msk [vmem:[#allocation0] sm:$0x1] %vm63, %v62
    %s65 = scalar_lea.vmem %s0, 5
    %v66 = vld [vmem:[%s65] sm:$0x1]
    %67 = vrot.lane.b32.xlu0 %v66, 40
    %v68 = vpop.permute.xlu0 %67
    %vm69 = vcmask 392512
    %70 = vst.msk [vmem:[#allocation0] sm:$0x1] %vm69, %v68
    %s71 = scalar_lea.vmem %s0, 4
    %v72 = vld [vmem:[%s71] sm:$0x1]
    %73 = vrot.lane.b32.xlu0 %v72, 32
    %v74 = vpop.permute.xlu0 %73
    %vm75 = vcmask 326912
    %76 = vst.msk [vmem:[#allocation0] sm:$0x1] %vm75, %v74
    %s77 = scalar_lea.vmem %s0, 3
    %v78 = vld [vmem:[%s77] sm:$0x1]
    %79 = vrot.lane.b32.xlu0 %v78, 24
    %v80 = vpop.permute.xlu0 %79
    %vm81 = vcmask 261312
    %82 = vst.msk [vmem:[#allocation0] sm:$0x1] %vm81, %v80
    %s83 = scalar_lea.vmem %s0, 2
    %v84 = vld [vmem:[%s83] sm:$0x1]
    %85 = vrot.lane.b32.xlu0 %v84, 16
    %v86 = vpop.permute.xlu0 %85
    %vm87 = vcmask 195712
    %88 = vst.msk [vmem:[#allocation0] sm:$0x1] %vm87, %v86
    %s89 = scalar_lea.vmem %s0, 1
    %v90 = vld [vmem:[%s89] sm:$0x1]
    %91 = vrot.lane.b32.xlu0 %v90, 8
    %v92 = vpop.permute.xlu0 %91
    %vm93 = vcmask 130112
    %94 = vst.msk [vmem:[#allocation0] sm:$0x1] %vm93, %v92
    %s96 = sshll.u32 1, 1
    %s97 = ssub.s32 %s96, 1
    %v99 = vld [vmem:[#allocation0] sm:%s97]
    %s100 = sshll.u32 1, 1
    %s101 = ssub.s32 %s100, 1
    %102 = vst [vmem:[%s1] sm:%s101] %v99

// kernel: double_conv_block.1
$region0: #{double_conv_block.1}
  #allocation0 [shape = 'u32[]', space=smem, size = 0x4, offset = 0x4, fixed_abs, tag = 'smem constant byte address 0x4 - core index']
  #allocation1 [shape = 'u32[144,128]{1,0:T(1,128)}', space=vmem, size = 0x12000, scoped, tag = 'internal scratch']
  %s0 = inlined_call_operand.vmem [shape: f32[32,64], index: 0, kind: input, shape index: {}]
  %s1 = inlined_call_operand.vmem [shape: f32[3,64,128], index: 1, kind: input, shape index: {}]
  %s2 = inlined_call_operand.vmem [shape: f32[1,128], index: 2, kind: input, shape index: {}]
  %s3 = inlined_call_operand.vmem [shape: f32[1,128], index: 3, kind: input, shape index: {}]
  %s4 = inlined_call_operand.vmem [shape: f32[1,128], index: 4, kind: input, shape index: {}]
  %s5 = inlined_call_operand.vmem [shape: f32[3,128,128], index: 5, kind: input, shape index: {}]
  %s6 = inlined_call_operand.vmem [shape: f32[1,128], index: 6, kind: input, shape index: {}]
  %s7 = inlined_call_operand.vmem [shape: f32[1,128], index: 7, kind: input, shape index: {}]
  %s8 = inlined_call_operand.vmem [shape: f32[1,128], index: 8, kind: input, shape index: {}]
  %s9 = inlined_call_operand.vmem [shape: f32[128,128], index: 9, kind: input, shape index: {}]
  %s10 = inlined_call_operand.vmem [shape: f32[32,128], index: 10, kind: output, shape index: {}]
  %s11 = sld [smem:[#allocation0]]
  $region50: #{double_conv_block.1} parent=0
    _
  %s13 = ssub.s32 1, %s11
  %s14 = scalar_select 0, %s13, %s11
  // Predicated region
  $region2: #{double_conv_block.1} parent=0 // pred_check
    _
  $region3: #{double_conv_block.1} parent=0 // pred_check_branch
    %16 = sbr.rel (0) target = $region5
  $region4: #{double_conv_block.1} parent=0 // pred_region
    _
  $region5: #{double_conv_block.1} parent=0 // pred_fallthru
    _
  // Predicated region
  $region6: #{double_conv_block.1} parent=0 // pred_check
    _
  $region7: #{double_conv_block.1} parent=0 // pred_check_branch
    %18 = sbr.rel (0) target = $region9
  $region8: #{double_conv_block.1} parent=0 // pred_region
    _
  $region9: #{double_conv_block.1} parent=0 // pred_fallthru
    _
  // Predicated region
  $region10: #{double_conv_block.1} parent=0 // pred_check
    _
  $region11: #{double_conv_block.1} parent=0 // pred_check_branch
    %20 = sbr.rel (0) target = $region13
  $region12: #{double_conv_block.1} parent=0 // pred_region
    _
  $region13: #{double_conv_block.1} parent=0 // pred_fallthru
    _
  // Predicated region
  $region14: #{double_conv_block.1} parent=0 // pred_check
    _
  $region15: #{double_conv_block.1} parent=0 // pred_check_branch
    %22 = sbr.rel (0) target = $region17
  $region16: #{double_conv_block.1} parent=0 // pred_region
    _
  $region17: #{double_conv_block.1} parent=0 // pred_fallthru
    _
  // Predicated region
  $region18: #{double_conv_block.1} parent=0 // pred_check
    _
  $region19: #{double_conv_block.1} parent=0 // pred_check_branch
    %24 = sbr.rel (0) target = $region21
  $region20: #{double_conv_block.1} parent=0 // pred_region
    _
  $region21: #{double_conv_block.1} parent=0 // pred_fallthru
    _
  // Predicated region
  $region22: #{double_conv_block.1} parent=0 // pred_check
    _
  $region23: #{double_conv_block.1} parent=0 // pred_check_branch
    %26 = sbr.rel (0) target = $region25
  $region24: #{double_conv_block.1} parent=0 // pred_region
    _
  $region25: #{double_conv_block.1} parent=0 // pred_fallthru
    _
  // Predicated region
  $region26: #{double_conv_block.1} parent=0 // pred_check
    _
  $region27: #{double_conv_block.1} parent=0 // pred_check_branch
    %28 = sbr.rel (0) target = $region29
  $region28: #{double_conv_block.1} parent=0 // pred_region
    _
  $region29: #{double_conv_block.1} parent=0 // pred_fallthru
    _
  // Predicated region
  $region30: #{double_conv_block.1} parent=0 // pred_check
    _
  $region31: #{double_conv_block.1} parent=0 // pred_check_branch
    %30 = sbr.rel (0) target = $region33
  $region32: #{double_conv_block.1} parent=0 // pred_region
    _
  $region33: #{double_conv_block.1} parent=0 // pred_fallthru
    _
  // Predicated region
  $region34: #{double_conv_block.1} parent=0 // pred_check
    _
  $region35: #{double_conv_block.1} parent=0 // pred_check_branch
    %32 = sbr.rel (0) target = $region37
  $region36: #{double_conv_block.1} parent=0 // pred_region
    _
  $region37: #{double_conv_block.1} parent=0 // pred_fallthru
    _
  // Predicated region
  $region38: #{double_conv_block.1} parent=0 // pred_check
    _
  $region39: #{double_conv_block.1} parent=0 // pred_check_branch
    %34 = sbr.rel (0) target = $region41
  $region40: #{double_conv_block.1} parent=0 // pred_region
    _
  $region41: #{double_conv_block.1} parent=0 // pred_fallthru
    _
  %v35 = vld [vmem:[%s9] sm:$0xff]
  %v36 = vld [vmem:[%s9 + $0x8] sm:$0xff]
  %v37 = vld [vmem:[%s9 + $0x10] sm:$0xff]
  %v38 = vld [vmem:[%s9 + $0x18] sm:$0xff]
  %v39 = vld [vmem:[%s9 + $0x20] sm:$0xff]
  %v40 = vld [vmem:[%s9 + $0x28] sm:$0xff]
  %v41 = vld [vmem:[%s9 + $0x30] sm:$0xff]
  %v42 = vld [vmem:[%s9 + $0x38] sm:$0xff]
  %v43 = vld [vmem:[%s9 + $0x40] sm:$0xff]
  %v44 = vld [vmem:[%s9 + $0x48] sm:$0xff]
  %v45 = vld [vmem:[%s9 + $0x50] sm:$0xff]
  %v46 = vld [vmem:[%s9 + $0x58] sm:$0xff]
  %v47 = vld [vmem:[%s9 + $0x60] sm:$0xff]
  %v48 = vld [vmem:[%s9 + $0x68] sm:$0xff]
  %v49 = vld [vmem:[%s9 + $0x70] sm:$0xff]
  %v50 = vld [vmem:[%s9 + $0x78] sm:$0xff]
  %v51 = vld [vmem:[%s0] sm:$0xff]
  %v52 = vld [vmem:[%s0 + $0x8] sm:$0xff]
  %v53 = vld [vmem:[%s0 + $0x10] sm:$0xff]
  %v54 = vld [vmem:[%s0 + $0x18] sm:$0xff]
  %v55 = vld [vmem:[%s2] sm:$0x1]
  %v56 = vld [vmem:[%s3] sm:$0x1]
  %v57 = vld [vmem:[%s4] sm:$0x1]
  %s58 = scalar_lea.vmem %s1, 64
  %v59 = vld [vmem:[%s58] sm:$0xff]
  %v60 = vld [vmem:[%s58 + $0x8] sm:$0xff]
  %v61 = vld [vmem:[%s58 + $0x10] sm:$0xff]
  %v62 = vld [vmem:[%s58 + $0x18] sm:$0xff]
  %v63 = vld [vmem:[%s58 + $0x20] sm:$0xff]
  %v64 = vld [vmem:[%s58 + $0x28] sm:$0xff]
  %v65 = vld [vmem:[%s58 + $0x30] sm:$0xff]
  %v66 = vld [vmem:[%s58 + $0x38] sm:$0xff]
  %v67 = vlaneseq
  %v68 = vshrl.u32 %v67, 7
  %v69 = vadd.s32 %v68, 8
  %v70 = vrot.slane %v51, 7
  %v71 = vrot.slane %v52, 7
  %v72 = vrot.slane %v53, 7
  %v73 = vrot.slane %v54, 7
  %vm74 = vcmp.lt.s32.totalorder %v68, 1
  %v75 = vsel %vm74, %v72, %v73
  %v76 = vsel %vm74, %v71, %v72
  %v77 = vsel %vm74, %v70, %v71
  %v78 = vsel %vm74, %v73, %v70
  %vm79 = vcmp.eq.s32.totalorder %v68, 0
  %vm80 = vcmp.eq.s32.totalorder %v69, 0
  %v81 = vsel %vm79, 0.0, %v78
  %v82 = vsel %vm80, 0.0, %v77
  %v83 = vsel %vm79, 0.0, %v76
  %v84 = vsel %vm80, 0.0, %v75
  %v85 = vld [vmem:[%s1] sm:$0xff]
  %v86 = vld [vmem:[%s1 + $0x8] sm:$0xff]
  %v87 = vld [vmem:[%s1 + $0x10] sm:$0xff]
  %v88 = vld [vmem:[%s1 + $0x18] sm:$0xff]
  %v89 = vld [vmem:[%s1 + $0x20] sm:$0xff]
  %v90 = vld [vmem:[%s1 + $0x28] sm:$0xff]
  %v91 = vld [vmem:[%s1 + $0x30] sm:$0xff]
  %v92 = vld [vmem:[%s1 + $0x38] sm:$0xff]
  %vm93 = vcmask 523264
  %v95 = vsel %vm93, %v81, 0
  %v98 = vsel %vm93, %v82, 0
  %v101 = vsel %vm93, %v83, 0
  %v104 = vsel %vm93, %v84, 0
  %106 = vmatprep.subr.mxu0 0.0
  %107 = vmatpush1.msra.mxu0 0.0
  %108 = vmatprep.subr.mxu0 0.0
  %109 = vmatpush1.msra.mxu0 0.0
  %110 = vmatprep.subr.mxu0 0.0
  %111 = vmatpush1.msra.mxu0 0.0
  %112 = vmatprep.subr.mxu0 0.0
  %113 = vmatpush1.msra.mxu0 0.0
  %114 = vmatprep.subr.mxu0 0.0
  %115 = vmatpush1.msra.mxu0 0.0
  %116 = vmatprep.subr.mxu0 0.0
  %117 = vmatpush1.msra.mxu0 0.0
  %118 = vmatprep.subr.mxu0 0.0
  %119 = vmatpush1.msra.mxu0 0.0
  %120 = vmatprep.subr.mxu0 0.0
  %121 = vmatpush1.msra.mxu0 0.0
  %122 = vmatprep.subr.mxu0 0.0
  %123 = vmatpush1.msra.mxu0 %v92
  %124 = vmatprep.subr.mxu0 0.0
  %125 = vmatpush1.msra.mxu0 %v91
  %126 = vmatprep.subr.mxu0 0.0
  %127 = vmatpush1.msra.mxu0 %v90
  %128 = vmatprep.subr.mxu0 0.0
  %129 = vmatpush1.msra.mxu0 %v89
  %130 = vmatprep.subr.mxu0 0.0
  %131 = vmatpush1.msra.mxu0 %v88
  %132 = vmatprep.subr.mxu0 0.0
  %133 = vmatpush1.msra.mxu0 %v87
  %134 = vmatprep.subr.mxu0 0.0
  %135 = vmatpush1.msra.mxu0 %v86
  %136 = vmatprep.subr.mxu0 0.0
  %137 = vmatpush1.msra.mxu0 %v85
  %138 = vmatprep.subr.mxu0 0.0
  %139 = vmatpush2.msra.mxu0 0.0
  %140 = vmatprep.subr.mxu0 0.0
  %141 = vmatpush2.msra.mxu0 0.0
  %142 = vmatprep.subr.mxu0 0.0
  %143 = vmatpush2.msra.mxu0 0.0
  %144 = vmatprep.subr.mxu0 0.0
  %145 = vmatpush2.msra.mxu0 0.0
  %146 = vmatprep.subr.mxu0 0.0
  %147 = vmatpush2.msra.mxu0 0.0
  %148 = vmatprep.subr.mxu0 0.0
  %149 = vmatpush2.msra.mxu0 0.0
  %150 = vmatprep.subr.mxu0 0.0
  %151 = vmatpush2.msra.mxu0 0.0
  %152 = vmatprep.subr.mxu0 0.0
  %153 = vmatpush2.msra.mxu0 0.0
  %154 = vmatprep.subr.mxu0 0.0
  %155 = vmatpush2.msra.mxu0 0.0
  %156 = vmatprep.subr.mxu0 0.0
  %157 = vmatpush2.msra.mxu0 0.0
  %158 = vmatprep.subr.mxu0 0.0
  %159 = vmatpush2.msra.mxu0 0.0
  %160 = vmatprep.subr.mxu0 0.0
  %161 = vmatpush2.msra.mxu0 0.0
  %162 = vmatprep.subr.mxu0 0.0
  %163 = vmatpush2.msra.mxu0 0.0
  %164 = vmatprep.subr.mxu0 0.0
  %165 = vmatpush2.msra.mxu0 0.0
  %166 = vmatprep.subr.mxu0 0.0
  %167 = vmatpush2.msra.mxu0 0.0
  %168 = vmatprep.subr.mxu0 0.0
  %169 = vmatpush2.msra.mxu0 0.0
  %170 = vmatprep.mubr.f32.mxu0 0.0
  %171 = vmatmul.mubr.f32.gmra.mxu0 %v95
  %v172 = vpop.f32.mrf.mxu0
  %v173 = vadd.f32 0.0, %v172
  %v174 = vpop.f32.mrf.mxu0
  %175 = vmatprep.mubr.f32.mxu0 0.0
  %176 = vmatmul.mubr.f32.gmra.mxu0 %v98
  %v177 = vpop.f32.mrf.mxu0
  %v178 = vadd.f32 0.0, %v177
  %v179 = vpop.f32.mrf.mxu0
  %180 = vmatprep.mubr.f32.mxu0 0.0
  %181 = vmatmul.mubr.f32.gmra.mxu0 %v101
  %v182 = vpop.f32.mrf.mxu0
  %v183 = vadd.f32 0.0, %v182
  %v184 = vpop.f32.mrf.mxu0
  %185 = vmatprep.mubr.f32.mxu0 0.0
  %186 = vmatmul.mubr.f32.gmra.mxu0 %v104
  %v187 = vpop.f32.mrf.mxu0
  %v188 = vadd.f32 0.0, %v187
  %v189 = vpop.f32.mrf.mxu0
  %190 = vdwg.mxu0
  %v192 = vsel %vm93, %v51, 0
  %v195 = vsel %vm93, %v52, 0
  %v198 = vsel %vm93, %v53, 0
  %v201 = vsel %vm93, %v54, 0
  %203 = vmatprep.subr.mxu0 0.0
  %204 = vmatpush1.msra.mxu0 0.0
  %205 = vmatprep.subr.mxu0 0.0
  %206 = vmatpush1.msra.mxu0 0.0
  %207 = vmatprep.subr.mxu0 0.0
  %208 = vmatpush1.msra.mxu0 0.0
  %209 = vmatprep.subr.mxu0 0.0
  %210 = vmatpush1.msra.mxu0 0.0
  %211 = vmatprep.subr.mxu0 0.0
  %212 = vmatpush1.msra.mxu0 0.0
  %213 = vmatprep.subr.mxu0 0.0
  %214 = vmatpush1.msra.mxu0 0.0
  %215 = vmatprep.subr.mxu0 0.0
  %216 = vmatpush1.msra.mxu0 0.0
  %217 = vmatprep.subr.mxu0 0.0
  %218 = vmatpush1.msra.mxu0 0.0
  %219 = vmatprep.subr.mxu0 0.0
  %220 = vmatpush1.msra.mxu0 %v66
  %221 = vmatprep.subr.mxu0 0.0
  %222 = vmatpush1.msra.mxu0 %v65
  %223 = vmatprep.subr.mxu0 0.0
  %224 = vmatpush1.msra.mxu0 %v64
  %225 = vmatprep.subr.mxu0 0.0
  %226 = vmatpush1.msra.mxu0 %v63
  %227 = vmatprep.subr.mxu0 0.0
  %228 = vmatpush1.msra.mxu0 %v62
  %229 = vmatprep.subr.mxu0 0.0
  %230 = vmatpush1.msra.mxu0 %v61
  %231 = vmatprep.subr.mxu0 0.0
  %232 = vmatpush1.msra.mxu0 %v60
  %233 = vmatprep.subr.mxu0 0.0
  %234 = vmatpush1.msra.mxu0 %v59
  %235 = vmatprep.subr.mxu0 0.0
  %236 = vmatpush2.msra.mxu0 0.0
  %237 = vmatprep.subr.mxu0 0.0
  %238 = vmatpush2.msra.mxu0 0.0
  %239 = vmatprep.subr.mxu0 0.0
  %240 = vmatpush2.msra.mxu0 0.0
  %241 = vmatprep.subr.mxu0 0.0
  %242 = vmatpush2.msra.mxu0 0.0
  %243 = vmatprep.subr.mxu0 0.0
  %244 = vmatpush2.msra.mxu0 0.0
  %245 = vmatprep.subr.mxu0 0.0
  %246 = vmatpush2.msra.mxu0 0.0
  %247 = vmatprep.subr.mxu0 0.0
  %248 = vmatpush2.msra.mxu0 0.0
  %249 = vmatprep.subr.mxu0 0.0
  %250 = vmatpush2.msra.mxu0 0.0
  %251 = vmatprep.subr.mxu0 0.0
  %252 = vmatpush2.msra.mxu0 0.0
  %253 = vmatprep.subr.mxu0 0.0
  %254 = vmatpush2.msra.mxu0 0.0
  %255 = vmatprep.subr.mxu0 0.0
  %256 = vmatpush2.msra.mxu0 0.0
  %257 = vmatprep.subr.mxu0 0.0
  %258 = vmatpush2.msra.mxu0 0.0
  %259 = vmatprep.subr.mxu0 0.0
  %260 = vmatpush2.msra.mxu0 0.0
  %261 = vmatprep.subr.mxu0 0.0
  %262 = vmatpush2.msra.mxu0 0.0
  %263 = vmatprep.subr.mxu0 0.0
  %264 = vmatpush2.msra.mxu0 0.0
  %265 = vmatprep.subr.mxu0 0.0
  %266 = vmatpush2.msra.mxu0 0.0
  %267 = vmatprep.mubr.f32.mxu0 0.0
  %268 = vmatmul.mubr.f32.gmra.mxu0 %v192
  %v269 = vpop.f32.mrf.mxu0
  %v270 = vadd.f32 %v173, %v269
  %v271 = vpop.f32.mrf.mxu0
  %272 = vmatprep.mubr.f32.mxu0 0.0
  %273 = vmatmul.mubr.f32.gmra.mxu0 %v195
  %v274 = vpop.f32.mrf.mxu0
  %v275 = vadd.f32 %v178, %v274
  %v276 = vpop.f32.mrf.mxu0
  %277 = vmatprep.mubr.f32.mxu0 0.0
  %278 = vmatmul.mubr.f32.gmra.mxu0 %v198
  %v279 = vpop.f32.mrf.mxu0
  %v280 = vadd.f32 %v183, %v279
  %v281 = vpop.f32.mrf.mxu0
  %282 = vmatprep.mubr.f32.mxu0 0.0
  %283 = vmatmul.mubr.f32.gmra.mxu0 %v201
  %v284 = vpop.f32.mrf.mxu0
  %v285 = vadd.f32 %v188, %v284
  %v286 = vpop.f32.mrf.mxu0
  %287 = vdwg.mxu0
  %v288 = vrot.slane %v51, 1
  %v289 = vrot.slane %v52, 1
  %v290 = vrot.slane %v53, 1
  %v291 = vrot.slane %v54, 1
  %vm292 = vcmp.lt.s32.totalorder %v68, 7
  %v293 = vsel %vm292, %v290, %v291
  %v294 = vsel %vm292, %v289, %v290
  %v295 = vsel %vm292, %v288, %v289
  %v296 = vsel %vm292, %v291, %v288
  %vm297 = vcmp.eq.s32.totalorder %v68, 15
  %vm298 = vcmp.eq.s32.totalorder %v69, 15
  %v299 = vsel %vm297, 0.0, %v295
  %v300 = vsel %vm298, 0.0, %v294
  %v301 = vsel %vm297, 0.0, %v293
  %v302 = vsel %vm298, 0.0, %v296
  %s303 = scalar_lea.vmem %s1, 128
  %v304 = vld [vmem:[%s303] sm:$0xff]
  %v305 = vld [vmem:[%s303 + $0x8] sm:$0xff]
  %v306 = vld [vmem:[%s303 + $0x10] sm:$0xff]
  %v307 = vld [vmem:[%s303 + $0x18] sm:$0xff]
  %v308 = vld [vmem:[%s303 + $0x20] sm:$0xff]
  %v309 = vld [vmem:[%s303 + $0x28] sm:$0xff]
  %v310 = vld [vmem:[%s303 + $0x30] sm:$0xff]
  %v311 = vld [vmem:[%s303 + $0x38] sm:$0xff]
  %v313 = vsel %vm93, %v299, 0
  %v316 = vsel %vm93, %v300, 0
  %v319 = vsel %vm93, %v301, 0
  %v322 = vsel %vm93, %v302, 0
  %324 = vmatprep.subr.mxu0 0.0
  %325 = vmatpush1.msra.mxu0 0.0
  %326 = vmatprep.subr.mxu0 0.0
  %327 = vmatpush1.msra.mxu0 0.0
  %328 = vmatprep.subr.mxu0 0.0
  %329 = vmatpush1.msra.mxu0 0.0
  %330 = vmatprep.subr.mxu0 0.0
  %331 = vmatpush1.msra.mxu0 0.0
  %332 = vmatprep.subr.mxu0 0.0
  %333 = vmatpush1.msra.mxu0 0.0
  %334 = vmatprep.subr.mxu0 0.0
  %335 = vmatpush1.msra.mxu0 0.0
  %336 = vmatprep.subr.mxu0 0.0
  %337 = vmatpush1.msra.mxu0 0.0
  %338 = vmatprep.subr.mxu0 0.0
  %339 = vmatpush1.msra.mxu0 0.0
  %340 = vmatprep.subr.mxu0 0.0
  %341 = vmatpush1.msra.mxu0 %v311
  %342 = vmatprep.subr.mxu0 0.0
  %343 = vmatpush1.msra.mxu0 %v310
  %344 = vmatprep.subr.mxu0 0.0
  %345 = vmatpush1.msra.mxu0 %v309
  %346 = vmatprep.subr.mxu0 0.0
  %347 = vmatpush1.msra.mxu0 %v308
  %348 = vmatprep.subr.mxu0 0.0
  %349 = vmatpush1.msra.mxu0 %v307
  %350 = vmatprep.subr.mxu0 0.0
  %351 = vmatpush1.msra.mxu0 %v306
  %352 = vmatprep.subr.mxu0 0.0
  %353 = vmatpush1.msra.mxu0 %v305
  %354 = vmatprep.subr.mxu0 0.0
  %355 = vmatpush1.msra.mxu0 %v304
  %356 = vmatprep.subr.mxu0 0.0
  %357 = vmatpush2.msra.mxu0 0.0
  %358 = vmatprep.subr.mxu0 0.0
  %359 = vmatpush2.msra.mxu0 0.0
  %360 = vmatprep.subr.mxu0 0.0
  %361 = vmatpush2.msra.mxu0 0.0
  %362 = vmatprep.subr.mxu0 0.0
  %363 = vmatpush2.msra.mxu0 0.0
  %364 = vmatprep.subr.mxu0 0.0
  %365 = vmatpush2.msra.mxu0 0.0
  %366 = vmatprep.subr.mxu0 0.0
  %367 = vmatpush2.msra.mxu0 0.0
  %368 = vmatprep.subr.mxu0 0.0
  %369 = vmatpush2.msra.mxu0 0.0
  %370 = vmatprep.subr.mxu0 0.0
  %371 = vmatpush2.msra.mxu0 0.0
  %372 = vmatprep.subr.mxu0 0.0
  %373 = vmatpush2.msra.mxu0 0.0
  %374 = vmatprep.subr.mxu0 0.0
  %375 = vmatpush2.msra.mxu0 0.0
  %376 = vmatprep.subr.mxu0 0.0
  %377 = vmatpush2.msra.mxu0 0.0
  %378 = vmatprep.subr.mxu0 0.0
  %379 = vmatpush2.msra.mxu0 0.0
  %380 = vmatprep.subr.mxu0 0.0
  %381 = vmatpush2.msra.mxu0 0.0
  %382 = vmatprep.subr.mxu0 0.0
  %383 = vmatpush2.msra.mxu0 0.0
  %384 = vmatprep.subr.mxu0 0.0
  %385 = vmatpush2.msra.mxu0 0.0
  %386 = vmatprep.subr.mxu0 0.0
  %387 = vmatpush2.msra.mxu0 0.0
  %388 = vmatprep.mubr.f32.mxu0 0.0
  %389 = vmatmul.mubr.f32.gmra.mxu0 %v313
  %v390 = vpop.f32.mrf.mxu0
  %v391 = vadd.f32 0.0, %v390
  %v392 = vpop.f32.mrf.mxu0
  %393 = vmatprep.mubr.f32.mxu0 0.0
  %394 = vmatmul.mubr.f32.gmra.mxu0 %v316
  %v395 = vpop.f32.mrf.mxu0
  %v396 = vadd.f32 0.0, %v395
  %v397 = vpop.f32.mrf.mxu0
  %398 = vmatprep.mubr.f32.mxu0 0.0
  %399 = vmatmul.mubr.f32.gmra.mxu0 %v319
  %v400 = vpop.f32.mrf.mxu0
  %v401 = vadd.f32 0.0, %v400
  %v402 = vpop.f32.mrf.mxu0
  %403 = vmatprep.mubr.f32.mxu0 0.0
  %404 = vmatmul.mubr.f32.gmra.mxu0 %v322
  %v405 = vpop.f32.mrf.mxu0
  %v406 = vadd.f32 0.0, %v405
  %v407 = vpop.f32.mrf.mxu0
  %408 = vdwg.mxu0
  %v409 = vadd.f32 %v270, %v391
  %v410 = vadd.f32 %v275, %v396
  %v411 = vadd.f32 %v280, %v401
  %v412 = vadd.f32 %v285, %v406
  %v414 = vlaneseq
  %v415 = vshrl.u32 %v414, 7
  %v416 = vsub.s32 0, %v415
  %v417 = vrot.slane %v55, %v416
  %v419 = vadd.f32 %v409, %v417
  %v420 = vadd.f32 %v410, %v417
  %v421 = vadd.f32 %v411, %v417
  %v422 = vadd.f32 %v412, %v417
  %v423 = vmax.f32 %v419, 0.0
  %v424 = vmax.f32 %v420, 0.0
  %v425 = vmax.f32 %v421, 0.0
  %v426 = vmax.f32 %v422, 0.0
  %427 = vmatprep.subr.mxu0 0.0
  %428 = vmatpush1.msra.mxu0 %v50
  %429 = vmatprep.subr.mxu0 0.0
  %430 = vmatpush1.msra.mxu0 %v49
  %431 = vmatprep.subr.mxu0 0.0
  %432 = vmatpush1.msra.mxu0 %v48
  %433 = vmatprep.subr.mxu0 0.0
  %434 = vmatpush1.msra.mxu0 %v47
  %435 = vmatprep.subr.mxu0 0.0
  %436 = vmatpush1.msra.mxu0 %v46
  %437 = vmatprep.subr.mxu0 0.0
  %438 = vmatpush1.msra.mxu0 %v45
  %439 = vmatprep.subr.mxu0 0.0
  %440 = vmatpush1.msra.mxu0 %v44
  %441 = vmatprep.subr.mxu0 0.0
  %442 = vmatpush1.msra.mxu0 %v43
  %443 = vmatprep.subr.mxu0 0.0
  %444 = vmatpush1.msra.mxu0 %v42
  %445 = vmatprep.subr.mxu0 0.0
  %446 = vmatpush1.msra.mxu0 %v41
  %447 = vmatprep.subr.mxu0 0.0
  %448 = vmatpush1.msra.mxu0 %v40
  %449 = vmatprep.subr.mxu0 0.0
  %450 = vmatpush1.msra.mxu0 %v39
  %451 = vmatprep.subr.mxu0 0.0
  %452 = vmatpush1.msra.mxu0 %v38
  %453 = vmatprep.subr.mxu0 0.0
  %454 = vmatpush1.msra.mxu0 %v37
  %455 = vmatprep.subr.mxu0 0.0
  %456 = vmatpush1.msra.mxu0 %v36
  %457 = vmatprep.subr.mxu0 0.0
  %458 = vmatpush1.msra.mxu0 %v35
  %459 = vmatprep.subr.mxu0 0.0
  %460 = vmatpush2.msra.mxu0 0.0
  %461 = vmatprep.subr.mxu0 0.0
  %462 = vmatpush2.msra.mxu0 0.0
  %463 = vmatprep.subr.mxu0 0.0
  %464 = vmatpush2.msra.mxu0 0.0
  %465 = vmatprep.subr.mxu0 0.0
  %466 = vmatpush2.msra.mxu0 0.0
  %467 = vmatprep.subr.mxu0 0.0
  %468 = vmatpush2.msra.mxu0 0.0
  %469 = vmatprep.subr.mxu0 0.0
  %470 = vmatpush2.msra.mxu0 0.0
  %471 = vmatprep.subr.mxu0 0.0
  %472 = vmatpush2.msra.mxu0 0.0
  %473 = vmatprep.subr.mxu0 0.0
  %474 = vmatpush2.msra.mxu0 0.0
  %475 = vmatprep.subr.mxu0 0.0
  %476 = vmatpush2.msra.mxu0 0.0
  %477 = vmatprep.subr.mxu0 0.0
  %478 = vmatpush2.msra.mxu0 0.0
  %479 = vmatprep.subr.mxu0 0.0
  %480 = vmatpush2.msra.mxu0 0.0
  %481 = vmatprep.subr.mxu0 0.0
  %482 = vmatpush2.msra.mxu0 0.0
  %483 = vmatprep.subr.mxu0 0.0
  %484 = vmatpush2.msra.mxu0 0.0
  %485 = vmatprep.subr.mxu0 0.0
  %486 = vmatpush2.msra.mxu0 0.0
  %487 = vmatprep.subr.mxu0 0.0
  %488 = vmatpush2.msra.mxu0 0.0
  %489 = vmatprep.subr.mxu0 0.0
  %490 = vmatpush2.msra.mxu0 0.0
  %491 = vmatprep.mubr.f32.mxu0 0.0
  %492 = vmatmul.mubr.f32.gmra.mxu0 %v423
  %v493 = vpop.f32.mrf.mxu0
  %v494 = vadd.f32 0.0, %v493
  %v495 = vpop.f32.mrf.mxu0
  %496 = vmatprep.mubr.f32.mxu0 0.0
  %497 = vmatmul.mubr.f32.gmra.mxu0 %v424
  %v498 = vpop.f32.mrf.mxu0
  %v499 = vadd.f32 0.0, %v498
  %v500 = vpop.f32.mrf.mxu0
  %501 = vmatprep.mubr.f32.mxu0 0.0
  %502 = vmatmul.mubr.f32.gmra.mxu0 %v425
  %v503 = vpop.f32.mrf.mxu0
  %v504 = vadd.f32 0.0, %v503
  %v505 = vpop.f32.mrf.mxu0
  %506 = vmatprep.mubr.f32.mxu0 0.0
  %507 = vmatmul.mubr.f32.gmra.mxu0 %v426
  %v508 = vpop.f32.mrf.mxu0
  %v509 = vadd.f32 0.0, %v508
  %v510 = vpop.f32.mrf.mxu0
  %511 = vdwg.mxu0
  %v512 = vadd.f32 %v494, %v499
  %v513 = vadd.f32 %v512, %v504
  %v514 = vadd.f32 %v513, %v509
  %v515 = vrot.slane %v514, 4
  %v516 = vadd.f32 %v514, %v515
  %v517 = vrot.slane %v516, 2
  %v518 = vadd.f32 %v516, %v517
  %v519 = vrot.slane %v518, 1
  %v520 = vadd.f32 %v518, %v519
  %v521 = vmul.f32 %v520, 0.001953125
  %v522 = vsub.f32 %v423, %v521
  %v523 = vsub.f32 %v424, %v521
  %v524 = vsub.f32 %v425, %v521
  %v525 = vsub.f32 %v426, %v521
  %v526 = vmul.f32 %v522, %v522
  %v527 = vmul.f32 %v523, %v523
  %v528 = vmul.f32 %v524, %v524
  %v529 = vmul.f32 %v525, %v525
  %530 = vmatprep.subr.mxu0 0.0
  %531 = vmatpush1.msra.mxu0 %v50
  %532 = vmatprep.subr.mxu0 0.0
  %533 = vmatpush1.msra.mxu0 %v49
  %534 = vmatprep.subr.mxu0 0.0
  %535 = vmatpush1.msra.mxu0 %v48
  %536 = vmatprep.subr.mxu0 0.0
  %537 = vmatpush1.msra.mxu0 %v47
  %538 = vmatprep.subr.mxu0 0.0
  %539 = vmatpush1.msra.mxu0 %v46
  %540 = vmatprep.subr.mxu0 0.0
  %541 = vmatpush1.msra.mxu0 %v45
  %542 = vmatprep.subr.mxu0 0.0
  %543 = vmatpush1.msra.mxu0 %v44
  %544 = vmatprep.subr.mxu0 0.0
  %545 = vmatpush1.msra.mxu0 %v43
  %546 = vmatprep.subr.mxu0 0.0
  %547 = vmatpush1.msra.mxu0 %v42
  %548 = vmatprep.subr.mxu0 0.0
  %549 = vmatpush1.msra.mxu0 %v41
  %550 = vmatprep.subr.mxu0 0.0
  %551 = vmatpush1.msra.mxu0 %v40
  %552 = vmatprep.subr.mxu0 0.0
  %553 = vmatpush1.msra.mxu0 %v39
  %554 = vmatprep.subr.mxu0 0.0
  %555 = vmatpush1.msra.mxu0 %v38
  %556 = vmatprep.subr.mxu0 0.0
  %557 = vmatpush1.msra.mxu0 %v37
  %558 = vmatprep.subr.mxu0 0.0
  %559 = vmatpush1.msra.mxu0 %v36
  %560 = vmatprep.subr.mxu0 0.0
  %561 = vmatpush1.msra.mxu0 %v35
  %562 = vmatprep.subr.mxu0 0.0
  %563 = vmatpush2.msra.mxu0 0.0
  %564 = vmatprep.subr.mxu0 0.0
  %565 = vmatpush2.msra.mxu0 0.0
  %566 = vmatprep.subr.mxu0 0.0
  %567 = vmatpush2.msra.mxu0 0.0
  %568 = vmatprep.subr.mxu0 0.0
  %569 = vmatpush2.msra.mxu0 0.0
  %570 = vmatprep.subr.mxu0 0.0
  %571 = vmatpush2.msra.mxu0 0.0
  %572 = vmatprep.subr.mxu0 0.0
  %573 = vmatpush2.msra.mxu0 0.0
  %574 = vmatprep.subr.mxu0 0.0
  %575 = vmatpush2.msra.mxu0 0.0
  %576 = vmatprep.subr.mxu0 0.0
  %577 = vmatpush2.msra.mxu0 0.0
  %578 = vmatprep.subr.mxu0 0.0
  %579 = vmatpush2.msra.mxu0 0.0
  %580 = vmatprep.subr.mxu0 0.0
  %581 = vmatpush2.msra.mxu0 0.0
  %582 = vmatprep.subr.mxu0 0.0
  %583 = vmatpush2.msra.mxu0 0.0
  %584 = vmatprep.subr.mxu0 0.0
  %585 = vmatpush2.msra.mxu0 0.0
  %586 = vmatprep.subr.mxu0 0.0
  %587 = vmatpush2.msra.mxu0 0.0
  %588 = vmatprep.subr.mxu0 0.0
  %589 = vmatpush2.msra.mxu0 0.0
  %590 = vmatprep.subr.mxu0 0.0
  %591 = vmatpush2.msra.mxu0 0.0
  %592 = vmatprep.subr.mxu0 0.0
  %593 = vmatpush2.msra.mxu0 0.0
  %594 = vmatprep.mubr.f32.mxu0 0.0
  %595 = vmatmul.mubr.f32.gmra.mxu0 %v526
  %v596 = vpop.f32.mrf.mxu0
  %v597 = vadd.f32 0.0, %v596
  %v598 = vpop.f32.mrf.mxu0
  %599 = vmatprep.mubr.f32.mxu0 0.0
  %600 = vmatmul.mubr.f32.gmra.mxu0 %v527
  %v601 = vpop.f32.mrf.mxu0
  %v602 = vadd.f32 0.0, %v601
  %v603 = vpop.f32.mrf.mxu0
  %604 = vmatprep.mubr.f32.mxu0 0.0
  %605 = vmatmul.mubr.f32.gmra.mxu0 %v528
  %v606 = vpop.f32.mrf.mxu0
  %v607 = vadd.f32 0.0, %v606
  %v608 = vpop.f32.mrf.mxu0
  %609 = vmatprep.mubr.f32.mxu0 0.0
  %610 = vmatmul.mubr.f32.gmra.mxu0 %v529
  %v611 = vpop.f32.mrf.mxu0
  %v612 = vadd.f32 0.0, %v611
  %v613 = vpop.f32.mrf.mxu0
  %614 = vdwg.mxu0
  %v615 = vadd.f32 %v597, %v602
  %v616 = vadd.f32 %v615, %v607
  %v617 = vadd.f32 %v616, %v612
  %v618 = vrot.slane %v617, 4
  %v619 = vadd.f32 %v617, %v618
  %v620 = vrot.slane %v619, 2
  %v621 = vadd.f32 %v619, %v620
  %v622 = vrot.slane %v621, 1
  %v623 = vadd.f32 %v621, %v622
  %v624 = vmul.f32 %v623, 0.001953125
  %v625 = vadd.f32 %v624, 1e-05
  %v626 = vrsqrt.pop %v625
  %v627 = vmul.f32 %v626, %v56
  %v628 = vlaneseq
  %v629 = vshrl.u32 %v628, 7
  %v630 = vsub.s32 0, %v629
  %v631 = vrot.slane %v627, %v630
  %v632 = vmul.f32 %v522, %v631
  %v633 = vmul.f32 %v523, %v631
  %v634 = vmul.f32 %v524, %v631
  %v635 = vmul.f32 %v525, %v631
  %v637 = vlaneseq
  %v638 = vshrl.u32 %v637, 7
  %v639 = vsub.s32 0, %v638
  %v640 = vrot.slane %v57, %v639
  %v642 = vadd.f32 %v632, %v640
  %v643 = vadd.f32 %v633, %v640
  %v644 = vadd.f32 %v634, %v640
  %v645 = vadd.f32 %v635, %v640
  %v646 = vld [vmem:[%s6] sm:$0x1]
  %v647 = vld [vmem:[%s7] sm:$0x1]
  %v648 = vld [vmem:[%s8] sm:$0x1]
  %s649 = scalar_lea.vmem %s5, 128
  %v650 = vld [vmem:[%s649] sm:$0xff]
  %v651 = vld [vmem:[%s649 + $0x8] sm:$0xff]
  %v652 = vld [vmem:[%s649 + $0x10] sm:$0xff]
  %v653 = vld [vmem:[%s649 + $0x18] sm:$0xff]
  %v654 = vld [vmem:[%s649 + $0x20] sm:$0xff]
  %v655 = vld [vmem:[%s649 + $0x28] sm:$0xff]
  %v656 = vld [vmem:[%s649 + $0x30] sm:$0xff]
  %v657 = vld [vmem:[%s649 + $0x38] sm:$0xff]
  %v658 = vld [vmem:[%s649 + $0x40] sm:$0xff]
  %v659 = vld [vmem:[%s649 + $0x48] sm:$0xff]
  %v660 = vld [vmem:[%s649 + $0x50] sm:$0xff]
  %v661 = vld [vmem:[%s649 + $0x58] sm:$0xff]
  %v662 = vld [vmem:[%s649 + $0x60] sm:$0xff]
  %v663 = vld [vmem:[%s649 + $0x68] sm:$0xff]
  %v664 = vld [vmem:[%s649 + $0x70] sm:$0xff]
  %v665 = vld [vmem:[%s649 + $0x78] sm:$0xff]
  %v666 = vrot.slane %v642, 7
  %v667 = vrot.slane %v643, 7
  %v668 = vrot.slane %v644, 7
  %v669 = vrot.slane %v645, 7
  %v670 = vsel %vm74, %v668, %v669
  %v671 = vsel %vm74, %v667, %v668
  %v672 = vsel %vm74, %v666, %v667
  %v673 = vsel %vm74, %v669, %v666
  %v674 = vsel %vm79, 0.0, %v673
  %v675 = vsel %vm80, 0.0, %v672
  %v676 = vsel %vm79, 0.0, %v671
  %v677 = vsel %vm80, 0.0, %v670
  %v678 = vld [vmem:[%s5] sm:$0xff]
  %v679 = vld [vmem:[%s5 + $0x8] sm:$0xff]
  %v680 = vld [vmem:[%s5 + $0x10] sm:$0xff]
  %v681 = vld [vmem:[%s5 + $0x18] sm:$0xff]
  %v682 = vld [vmem:[%s5 + $0x20] sm:$0xff]
  %v683 = vld [vmem:[%s5 + $0x28] sm:$0xff]
  %v684 = vld [vmem:[%s5 + $0x30] sm:$0xff]
  %v685 = vld [vmem:[%s5 + $0x38] sm:$0xff]
  %v686 = vld [vmem:[%s5 + $0x40] sm:$0xff]
  %v687 = vld [vmem:[%s5 + $0x48] sm:$0xff]
  %v688 = vld [vmem:[%s5 + $0x50] sm:$0xff]
  %v689 = vld [vmem:[%s5 + $0x58] sm:$0xff]
  %v690 = vld [vmem:[%s5 + $0x60] sm:$0xff]
  %v691 = vld [vmem:[%s5 + $0x68] sm:$0xff]
  %v692 = vld [vmem:[%s5 + $0x70] sm:$0xff]
  %v693 = vld [vmem:[%s5 + $0x78] sm:$0xff]
  %694 = vmatprep.subr.mxu0 0.0
  %695 = vmatpush1.msra.mxu0 %v693
  %696 = vmatprep.subr.mxu0 0.0
  %697 = vmatpush1.msra.mxu0 %v692
  %698 = vmatprep.subr.mxu0 0.0
  %699 = vmatpush1.msra.mxu0 %v691
  %700 = vmatprep.subr.mxu0 0.0
  %701 = vmatpush1.msra.mxu0 %v690
  %702 = vmatprep.subr.mxu0 0.0
  %703 = vmatpush1.msra.mxu0 %v689
  %704 = vmatprep.subr.mxu0 0.0
  %705 = vmatpush1.msra.mxu0 %v688
  %706 = vmatprep.subr.mxu0 0.0
  %707 = vmatpush1.msra.mxu0 %v687
  %708 = vmatprep.subr.mxu0 0.0
  %709 = vmatpush1.msra.mxu0 %v686
  %710 = vmatprep.subr.mxu0 0.0
  %711 = vmatpush1.msra.mxu0 %v685
  %712 = vmatprep.subr.mxu0 0.0
  %713 = vmatpush1.msra.mxu0 %v684
  %714 = vmatprep.subr.mxu0 0.0
  %715 = vmatpush1.msra.mxu0 %v683
  %716 = vmatprep.subr.mxu0 0.0
  %717 = vmatpush1.msra.mxu0 %v682
  %718 = vmatprep.subr.mxu0 0.0
  %719 = vmatpush1.msra.mxu0 %v681
  %720 = vmatprep.subr.mxu0 0.0
  %721 = vmatpush1.msra.mxu0 %v680
  %722 = vmatprep.subr.mxu0 0.0
  %723 = vmatpush1.msra.mxu0 %v679
  %724 = vmatprep.subr.mxu0 0.0
  %725 = vmatpush1.msra.mxu0 %v678
  %726 = vmatprep.subr.mxu0 0.0
  %727 = vmatpush2.msra.mxu0 0.0
  %728 = vmatprep.subr.mxu0 0.0
  %729 = vmatpush2.msra.mxu0 0.0
  %730 = vmatprep.subr.mxu0 0.0
  %731 = vmatpush2.msra.mxu0 0.0
  %732 = vmatprep.subr.mxu0 0.0
  %733 = vmatpush2.msra.mxu0 0.0
  %734 = vmatprep.subr.mxu0 0.0
  %735 = vmatpush2.msra.mxu0 0.0
  %736 = vmatprep.subr.mxu0 0.0
  %737 = vmatpush2.msra.mxu0 0.0
  %738 = vmatprep.subr.mxu0 0.0
  %739 = vmatpush2.msra.mxu0 0.0
  %740 = vmatprep.subr.mxu0 0.0
  %741 = vmatpush2.msra.mxu0 0.0
  %742 = vmatprep.subr.mxu0 0.0
  %743 = vmatpush2.msra.mxu0 0.0
  %744 = vmatprep.subr.mxu0 0.0
  %745 = vmatpush2.msra.mxu0 0.0
  %746 = vmatprep.subr.mxu0 0.0
  %747 = vmatpush2.msra.mxu0 0.0
  %748 = vmatprep.subr.mxu0 0.0
  %749 = vmatpush2.msra.mxu0 0.0
  %750 = vmatprep.subr.mxu0 0.0
  %751 = vmatpush2.msra.mxu0 0.0
  %752 = vmatprep.subr.mxu0 0.0
  %753 = vmatpush2.msra.mxu0 0.0
  %754 = vmatprep.subr.mxu0 0.0
  %755 = vmatpush2.msra.mxu0 0.0
  %756 = vmatprep.subr.mxu0 0.0
  %757 = vmatpush2.msra.mxu0 0.0
  %758 = vmatprep.mubr.f32.mxu0 0.0
  %759 = vmatmul.mubr.f32.gmra.mxu0 %v674
  %v760 = vpop.f32.mrf.mxu0
  %v761 = vadd.f32 0.0, %v760
  %v762 = vpop.f32.mrf.mxu0
  %763 = vmatprep.mubr.f32.mxu0 0.0
  %764 = vmatmul.mubr.f32.gmra.mxu0 %v675
  %v765 = vpop.f32.mrf.mxu0
  %v766 = vadd.f32 0.0, %v765
  %v767 = vpop.f32.mrf.mxu0
  %768 = vmatprep.mubr.f32.mxu0 0.0
  %769 = vmatmul.mubr.f32.gmra.mxu0 %v676
  %v770 = vpop.f32.mrf.mxu0
  %v771 = vadd.f32 0.0, %v770
  %v772 = vpop.f32.mrf.mxu0
  %773 = vmatprep.mubr.f32.mxu0 0.0
  %774 = vmatmul.mubr.f32.gmra.mxu0 %v677
  %v775 = vpop.f32.mrf.mxu0
  %v776 = vadd.f32 0.0, %v775
  %v777 = vpop.f32.mrf.mxu0
  %778 = vdwg.mxu0
  %779 = vmatprep.subr.mxu0 0.0
  %780 = vmatpush1.msra.mxu0 %v665
  %781 = vmatprep.subr.mxu0 0.0
  %782 = vmatpush1.msra.mxu0 %v664
  %783 = vmatprep.subr.mxu0 0.0
  %784 = vmatpush1.msra.mxu0 %v663
  %785 = vmatprep.subr.mxu0 0.0
  %786 = vmatpush1.msra.mxu0 %v662
  %787 = vmatprep.subr.mxu0 0.0
  %788 = vmatpush1.msra.mxu0 %v661
  %789 = vmatprep.subr.mxu0 0.0
  %790 = vmatpush1.msra.mxu0 %v660
  %791 = vmatprep.subr.mxu0 0.0
  %792 = vmatpush1.msra.mxu0 %v659
  %793 = vmatprep.subr.mxu0 0.0
  %794 = vmatpush1.msra.mxu0 %v658
  %795 = vmatprep.subr.mxu0 0.0
  %796 = vmatpush1.msra.mxu0 %v657
  %797 = vmatprep.subr.mxu0 0.0
  %798 = vmatpush1.msra.mxu0 %v656
  %799 = vmatprep.subr.mxu0 0.0
  %800 = vmatpush1.msra.mxu0 %v655
  %801 = vmatprep.subr.mxu0 0.0
  %802 = vmatpush1.msra.mxu0 %v654
  %803 = vmatprep.subr.mxu0 0.0
  %804 = vmatpush1.msra.mxu0 %v653
  %805 = vmatprep.subr.mxu0 0.0
  %806 = vmatpush1.msra.mxu0 %v652
  %807 = vmatprep.subr.mxu0 0.0
  %808 = vmatpush1.msra.mxu0 %v651
  %809 = vmatprep.subr.mxu0 0.0
  %810 = vmatpush1.msra.mxu0 %v650
  %811 = vmatprep.subr.mxu0 0.0
  %812 = vmatpush2.msra.mxu0 0.0
  %813 = vmatprep.subr.mxu0 0.0
  %814 = vmatpush2.msra.mxu0 0.0
  %815 = vmatprep.subr.mxu0 0.0
  %816 = vmatpush2.msra.mxu0 0.0
  %817 = vmatprep.subr.mxu0 0.0
  %818 = vmatpush2.msra.mxu0 0.0
  %819 = vmatprep.subr.mxu0 0.0
  %820 = vmatpush2.msra.mxu0 0.0
  %821 = vmatprep.subr.mxu0 0.0
  %822 = vmatpush2.msra.mxu0 0.0
  %823 = vmatprep.subr.mxu0 0.0
  %824 = vmatpush2.msra.mxu0 0.0
  %825 = vmatprep.subr.mxu0 0.0
  %826 = vmatpush2.msra.mxu0 0.0
  %827 = vmatprep.subr.mxu0 0.0
  %828 = vmatpush2.msra.mxu0 0.0
  %829 = vmatprep.subr.mxu0 0.0
  %830 = vmatpush2.msra.mxu0 0.0
  %831 = vmatprep.subr.mxu0 0.0
  %832 = vmatpush2.msra.mxu0 0.0
  %833 = vmatprep.subr.mxu0 0.0
  %834 = vmatpush2.msra.mxu0 0.0
  %835 = vmatprep.subr.mxu0 0.0
  %836 = vmatpush2.msra.mxu0 0.0
  %837 = vmatprep.subr.mxu0 0.0
  %838 = vmatpush2.msra.mxu0 0.0
  %839 = vmatprep.subr.mxu0 0.0
  %840 = vmatpush2.msra.mxu0 0.0
  %841 = vmatprep.subr.mxu0 0.0
  %842 = vmatpush2.msra.mxu0 0.0
  %843 = vmatprep.mubr.f32.mxu0 0.0
  %844 = vmatmul.mubr.f32.gmra.mxu0 %v642
  %v845 = vpop.f32.mrf.mxu0
  %v846 = vadd.f32 %v761, %v845
  %v847 = vpop.f32.mrf.mxu0
  %848 = vmatprep.mubr.f32.mxu0 0.0
  %849 = vmatmul.mubr.f32.gmra.mxu0 %v643
  %v850 = vpop.f32.mrf.mxu0
  %v851 = vadd.f32 %v766, %v850
  %v852 = vpop.f32.mrf.mxu0
  %853 = vmatprep.mubr.f32.mxu0 0.0
  %854 = vmatmul.mubr.f32.gmra.mxu0 %v644
  %v855 = vpop.f32.mrf.mxu0
  %v856 = vadd.f32 %v771, %v855
  %v857 = vpop.f32.mrf.mxu0
  %858 = vmatprep.mubr.f32.mxu0 0.0
  %859 = vmatmul.mubr.f32.gmra.mxu0 %v645
  %v860 = vpop.f32.mrf.mxu0
  %v861 = vadd.f32 %v776, %v860
  %v862 = vpop.f32.mrf.mxu0
  %863 = vdwg.mxu0
  %v864 = vrot.slane %v642, 1
  %v865 = vrot.slane %v643, 1
  %v866 = vrot.slane %v644, 1
  %v867 = vrot.slane %v645, 1
  %v868 = vsel %vm292, %v866, %v867
  %v869 = vsel %vm292, %v865, %v866
  %v870 = vsel %vm292, %v864, %v865
  %v871 = vsel %vm292, %v867, %v864
  %v872 = vsel %vm297, 0.0, %v870
  %v873 = vsel %vm298, 0.0, %v869
  %v874 = vsel %vm297, 0.0, %v868
  %v875 = vsel %vm298, 0.0, %v871
  %s876 = scalar_lea.vmem %s5, 256
  %v877 = vld [vmem:[%s876] sm:$0xff]
  %v878 = vld [vmem:[%s876 + $0x8] sm:$0xff]
  %v879 = vld [vmem:[%s876 + $0x10] sm:$0xff]
  %v880 = vld [vmem:[%s876 + $0x18] sm:$0xff]
  %v881 = vld [vmem:[%s876 + $0x20] sm:$0xff]
  %v882 = vld [vmem:[%s876 + $0x28] sm:$0xff]
  %v883 = vld [vmem:[%s876 + $0x30] sm:$0xff]
  %v884 = vld [vmem:[%s876 + $0x38] sm:$0xff]
  %v885 = vld [vmem:[%s876 + $0x40] sm:$0xff]
  %v886 = vld [vmem:[%s876 + $0x48] sm:$0xff]
  %v887 = vld [vmem:[%s876 + $0x50] sm:$0xff]
  %v888 = vld [vmem:[%s876 + $0x58] sm:$0xff]
  %v889 = vld [vmem:[%s876 + $0x60] sm:$0xff]
  %v890 = vld [vmem:[%s876 + $0x68] sm:$0xff]
  %v891 = vld [vmem:[%s876 + $0x70] sm:$0xff]
  %v892 = vld [vmem:[%s876 + $0x78] sm:$0xff]
  %893 = vmatprep.subr.mxu0 0.0
  %894 = vmatpush1.msra.mxu0 %v892
  %895 = vmatprep.subr.mxu0 0.0
  %896 = vmatpush1.msra.mxu0 %v891
  %897 = vmatprep.subr.mxu0 0.0
  %898 = vmatpush1.msra.mxu0 %v890
  %899 = vmatprep.subr.mxu0 0.0
  %900 = vmatpush1.msra.mxu0 %v889
  %901 = vmatprep.subr.mxu0 0.0
  %902 = vmatpush1.msra.mxu0 %v888
  %903 = vmatprep.subr.mxu0 0.0
  %904 = vmatpush1.msra.mxu0 %v887
  %905 = vmatprep.subr.mxu0 0.0
  %906 = vmatpush1.msra.mxu0 %v886
  %907 = vmatprep.subr.mxu0 0.0
  %908 = vmatpush1.msra.mxu0 %v885
  %909 = vmatprep.subr.mxu0 0.0
  %910 = vmatpush1.msra.mxu0 %v884
  %911 = vmatprep.subr.mxu0 0.0
  %912 = vmatpush1.msra.mxu0 %v883
  %913 = vmatprep.subr.mxu0 0.0
  %914 = vmatpush1.msra.mxu0 %v882
  %915 = vmatprep.subr.mxu0 0.0
  %916 = vmatpush1.msra.mxu0 %v881
  %917 = vmatprep.subr.mxu0 0.0
  %918 = vmatpush1.msra.mxu0 %v880
  %919 = vmatprep.subr.mxu0 0.0
  %920 = vmatpush1.msra.mxu0 %v879
  %921 = vmatprep.subr.mxu0 0.0
  %922 = vmatpush1.msra.mxu0 %v878
  %923 = vmatprep.subr.mxu0 0.0
  %924 = vmatpush1.msra.mxu0 %v877
  %925 = vmatprep.subr.mxu0 0.0
  %926 = vmatpush2.msra.mxu0 0.0
  %927 = vmatprep.subr.mxu0 0.0
  %928 = vmatpush2.msra.mxu0 0.0
  %929 = vmatprep.subr.mxu0 0.0
  %930 = vmatpush2.msra.mxu0 0.0
  %931 = vmatprep.subr.mxu0 0.0
  %932 = vmatpush2.msra.mxu0 0.0
  %933 = vmatprep.subr.mxu0 0.0
  %934 = vmatpush2.msra.mxu0 0.0
  %935 = vmatprep.subr.mxu0 0.0
  %936 = vmatpush2.msra.mxu0 0.0
  %937 = vmatprep.subr.mxu0 0.0
  %938 = vmatpush2.msra.mxu0 0.0
  %939 = vmatprep.subr.mxu0 0.0
  %940 = vmatpush2.msra.mxu0 0.0
  %941 = vmatprep.subr.mxu0 0.0
  %942 = vmatpush2.msra.mxu0 0.0
  %943 = vmatprep.subr.mxu0 0.0
  %944 = vmatpush2.msra.mxu0 0.0
  %945 = vmatprep.subr.mxu0 0.0
  %946 = vmatpush2.msra.mxu0 0.0
  %947 = vmatprep.subr.mxu0 0.0
  %948 = vmatpush2.msra.mxu0 0.0
  %949 = vmatprep.subr.mxu0 0.0
  %950 = vmatpush2.msra.mxu0 0.0
  %951 = vmatprep.subr.mxu0 0.0
  %952 = vmatpush2.msra.mxu0 0.0
  %953 = vmatprep.subr.mxu0 0.0
  %954 = vmatpush2.msra.mxu0 0.0
  %955 = vmatprep.subr.mxu0 0.0
  %956 = vmatpush2.msra.mxu0 0.0
  %957 = vmatprep.mubr.f32.mxu0 0.0
  %958 = vmatmul.mubr.f32.gmra.mxu0 %v872
  %v959 = vpop.f32.mrf.mxu0
  %v960 = vadd.f32 0.0, %v959
  %v961 = vpop.f32.mrf.mxu0
  %962 = vmatprep.mubr.f32.mxu0 0.0
  %963 = vmatmul.mubr.f32.gmra.mxu0 %v873
  %v964 = vpop.f32.mrf.mxu0
  %v965 = vadd.f32 0.0, %v964
  %v966 = vpop.f32.mrf.mxu0
  %967 = vmatprep.mubr.f32.mxu0 0.0
  %968 = vmatmul.mubr.f32.gmra.mxu0 %v874
  %v969 = vpop.f32.mrf.mxu0
  %v970 = vadd.f32 0.0, %v969
  %v971 = vpop.f32.mrf.mxu0
  %972 = vmatprep.mubr.f32.mxu0 0.0
  %973 = vmatmul.mubr.f32.gmra.mxu0 %v875
  %v974 = vpop.f32.mrf.mxu0
  %v975 = vadd.f32 0.0, %v974
  %v976 = vpop.f32.mrf.mxu0
  %977 = vdwg.mxu0
  %v978 = vadd.f32 %v846, %v960
  %v979 = vadd.f32 %v851, %v965
  %v980 = vadd.f32 %v856, %v970
  %v981 = vadd.f32 %v861, %v975
  %v983 = vlaneseq
  %v984 = vshrl.u32 %v983, 7
  %v985 = vsub.s32 0, %v984
  %v986 = vrot.slane %v646, %v985
  %v988 = vadd.f32 %v978, %v986
  %v989 = vadd.f32 %v979, %v986
  %v990 = vadd.f32 %v980, %v986
  %v991 = vadd.f32 %v981, %v986
  %v992 = vmax.f32 %v988, 0.0
  %v993 = vmax.f32 %v989, 0.0
  %v994 = vmax.f32 %v990, 0.0
  %v995 = vmax.f32 %v991, 0.0
  %996 = vmatprep.subr.mxu0 0.0
  %997 = vmatpush1.msra.mxu0 %v50
  %998 = vmatprep.subr.mxu0 0.0
  %999 = vmatpush1.msra.mxu0 %v49
  %1000 = vmatprep.subr.mxu0 0.0
  %1001 = vmatpush1.msra.mxu0 %v48
  %1002 = vmatprep.subr.mxu0 0.0
  %1003 = vmatpush1.msra.mxu0 %v47
  %1004 = vmatprep.subr.mxu0 0.0
  %1005 = vmatpush1.msra.mxu0 %v46
  %1006 = vmatprep.subr.mxu0 0.0
  %1007 = vmatpush1.msra.mxu0 %v45
  %1008 = vmatprep.subr.mxu0 0.0
  %1009 = vmatpush1.msra.mxu0 %v44
  %1010 = vmatprep.subr.mxu0 0.0
  %1011 = vmatpush1.msra.mxu0 %v43
  %1012 = vmatprep.subr.mxu0 0.0
  %1013 = vmatpush1.msra.mxu0 %v42
  %1014 = vmatprep.subr.mxu0 0.0
  %1015 = vmatpush1.msra.mxu0 %v41
  %1016 = vmatprep.subr.mxu0 0.0
  %1017 = vmatpush1.msra.mxu0 %v40
  %1018 = vmatprep.subr.mxu0 0.0
  %1019 = vmatpush1.msra.mxu0 %v39
  %1020 = vmatprep.subr.mxu0 0.0
  %1021 = vmatpush1.msra.mxu0 %v38
  %1022 = vmatprep.subr.mxu0 0.0
  %1023 = vmatpush1.msra.mxu0 %v37
  %1024 = vmatprep.subr.mxu0 0.0
  %1025 = vmatpush1.msra.mxu0 %v36
  %1026 = vmatprep.subr.mxu0 0.0
  %1027 = vmatpush1.msra.mxu0 %v35
  %1028 = vmatprep.subr.mxu0 0.0
  %1029 = vmatpush2.msra.mxu0 0.0
  %1030 = vmatprep.subr.mxu0 0.0
  %1031 = vmatpush2.msra.mxu0 0.0
  %1032 = vmatprep.subr.mxu0 0.0
  %1033 = vmatpush2.msra.mxu0 0.0
  %1034 = vmatprep.subr.mxu0 0.0
  %1035 = vmatpush2.msra.mxu0 0.0
  %1036 = vmatprep.subr.mxu0 0.0
  %1037 = vmatpush2.msra.mxu0 0.0
  %1038 = vmatprep.subr.mxu0 0.0
  %1039 = vmatpush2.msra.mxu0 0.0
  %1040 = vmatprep.subr.mxu0 0.0
  %1041 = vmatpush2.msra.mxu0 0.0
  %1042 = vmatprep.subr.mxu0 0.0
  %1043 = vmatpush2.msra.mxu0 0.0
  %1044 = vmatprep.subr.mxu0 0.0
  %1045 = vmatpush2.msra.mxu0 0.0
  %1046 = vmatprep.subr.mxu0 0.0
  %1047 = vmatpush2.msra.mxu0 0.0
  %1048 = vmatprep.subr.mxu0 0.0
  %1049 = vmatpush2.msra.mxu0 0.0
  %1050 = vmatprep.subr.mxu0 0.0
  %1051 = vmatpush2.msra.mxu0 0.0
  %1052 = vmatprep.subr.mxu0 0.0
  %1053 = vmatpush2.msra.mxu0 0.0
  %1054 = vmatprep.subr.mxu0 0.0
  %1055 = vmatpush2.msra.mxu0 0.0
  %1056 = vmatprep.subr.mxu0 0.0
  %1057 = vmatpush2.msra.mxu0 0.0
  %1058 = vmatprep.subr.mxu0 0.0
  %1059 = vmatpush2.msra.mxu0 0.0
  %1060 = vmatprep.mubr.f32.mxu0 0.0
  %1061 = vmatmul.mubr.f32.gmra.mxu0 %v992
  %v1062 = vpop.f32.mrf.mxu0
  %v1063 = vadd.f32 0.0, %v1062
  %v1064 = vpop.f32.mrf.mxu0
  %1065 = vmatprep.mubr.f32.mxu0 0.0
  %1066 = vmatmul.mubr.f32.gmra.mxu0 %v993
  %v1067 = vpop.f32.mrf.mxu0
  %v1068 = vadd.f32 0.0, %v1067
  %v1069 = vpop.f32.mrf.mxu0
  %1070 = vmatprep.mubr.f32.mxu0 0.0
  %1071 = vmatmul.mubr.f32.gmra.mxu0 %v994
  %v1072 = vpop.f32.mrf.mxu0
  %v1073 = vadd.f32 0.0, %v1072
  %v1074 = vpop.f32.mrf.mxu0
  %1075 = vmatprep.mubr.f32.mxu0 0.0
  %1076 = vmatmul.mubr.f32.gmra.mxu0 %v995
  %v1077 = vpop.f32.mrf.mxu0
  %v1078 = vadd.f32 0.0, %v1077
  %v1079 = vpop.f32.mrf.mxu0
  %1080 = vdwg.mxu0
  %v1081 = vadd.f32 %v1063, %v1068
  %v1082 = vadd.f32 %v1081, %v1073
  %v1083 = vadd.f32 %v1082, %v1078
  %v1084 = vrot.slane %v1083, 4
  %v1085 = vadd.f32 %v1083, %v1084
  %v1086 = vrot.slane %v1085, 2
  %v1087 = vadd.f32 %v1085, %v1086
  %v1088 = vrot.slane %v1087, 1
  %v1089 = vadd.f32 %v1087, %v1088
  %v1090 = vmul.f32 %v1089, 0.001953125
  %v1091 = vsub.f32 %v992, %v1090
  %v1092 = vsub.f32 %v993, %v1090
  %v1093 = vsub.f32 %v994, %v1090
  %v1094 = vsub.f32 %v995, %v1090
  %v1095 = vmul.f32 %v1091, %v1091
  %v1096 = vmul.f32 %v1092, %v1092
  %v1097 = vmul.f32 %v1093, %v1093
  %v1098 = vmul.f32 %v1094, %v1094
  %1099 = vmatprep.subr.mxu0 0.0
  %1100 = vmatpush1.msra.mxu0 %v50
  %1101 = vmatprep.subr.mxu0 0.0
  %1102 = vmatpush1.msra.mxu0 %v49
  %1103 = vmatprep.subr.mxu0 0.0
  %1104 = vmatpush1.msra.mxu0 %v48
  %1105 = vmatprep.subr.mxu0 0.0
  %1106 = vmatpush1.msra.mxu0 %v47
  %1107 = vmatprep.subr.mxu0 0.0
  %1108 = vmatpush1.msra.mxu0 %v46
  %1109 = vmatprep.subr.mxu0 0.0
  %1110 = vmatpush1.msra.mxu0 %v45
  %1111 = vmatprep.subr.mxu0 0.0
  %1112 = vmatpush1.msra.mxu0 %v44
  %1113 = vmatprep.subr.mxu0 0.0
  %1114 = vmatpush1.msra.mxu0 %v43
  %1115 = vmatprep.subr.mxu0 0.0
  %1116 = vmatpush1.msra.mxu0 %v42
  %1117 = vmatprep.subr.mxu0 0.0
  %1118 = vmatpush1.msra.mxu0 %v41
  %1119 = vmatprep.subr.mxu0 0.0
  %1120 = vmatpush1.msra.mxu0 %v40
  %1121 = vmatprep.subr.mxu0 0.0
  %1122 = vmatpush1.msra.mxu0 %v39
  %1123 = vmatprep.subr.mxu0 0.0
  %1124 = vmatpush1.msra.mxu0 %v38
  %1125 = vmatprep.subr.mxu0 0.0
  %1126 = vmatpush1.msra.mxu0 %v37
  %1127 = vmatprep.subr.mxu0 0.0
  %1128 = vmatpush1.msra.mxu0 %v36
  %1129 = vmatprep.subr.mxu0 0.0
  %1130 = vmatpush1.msra.mxu0 %v35
  %1131 = vmatprep.subr.mxu0 0.0
  %1132 = vmatpush2.msra.mxu0 0.0
  %1133 = vmatprep.subr.mxu0 0.0
  %1134 = vmatpush2.msra.mxu0 0.0
  %1135 = vmatprep.subr.mxu0 0.0
  %1136 = vmatpush2.msra.mxu0 0.0
  %1137 = vmatprep.subr.mxu0 0.0
  %1138 = vmatpush2.msra.mxu0 0.0
  %1139 = vmatprep.subr.mxu0 0.0
  %1140 = vmatpush2.msra.mxu0 0.0
  %1141 = vmatprep.subr.mxu0 0.0
  %1142 = vmatpush2.msra.mxu0 0.0
  %1143 = vmatprep.subr.mxu0 0.0
  %1144 = vmatpush2.msra.mxu0 0.0
  %1145 = vmatprep.subr.mxu0 0.0
  %1146 = vmatpush2.msra.mxu0 0.0
  %1147 = vmatprep.subr.mxu0 0.0
  %1148 = vmatpush2.msra.mxu0 0.0
  %1149 = vmatprep.subr.mxu0 0.0
  %1150 = vmatpush2.msra.mxu0 0.0
  %1151 = vmatprep.subr.mxu0 0.0
  %1152 = vmatpush2.msra.mxu0 0.0
  %1153 = vmatprep.subr.mxu0 0.0
  %1154 = vmatpush2.msra.mxu0 0.0
  %1155 = vmatprep.subr.mxu0 0.0
  %1156 = vmatpush2.msra.mxu0 0.0
  %1157 = vmatprep.subr.mxu0 0.0
  %1158 = vmatpush2.msra.mxu0 0.0
  %1159 = vmatprep.subr.mxu0 0.0
  %1160 = vmatpush2.msra.mxu0 0.0
  %1161 = vmatprep.subr.mxu0 0.0
  %1162 = vmatpush2.msra.mxu0 0.0
  %1163 = vmatprep.mubr.f32.mxu0 0.0
  %1164 = vmatmul.mubr.f32.gmra.mxu0 %v1095
  %v1165 = vpop.f32.mrf.mxu0
  %v1166 = vadd.f32 0.0, %v1165
  %v1167 = vpop.f32.mrf.mxu0
  %1168 = vmatprep.mubr.f32.mxu0 0.0
  %1169 = vmatmul.mubr.f32.gmra.mxu0 %v1096
  %v1170 = vpop.f32.mrf.mxu0
  %v1171 = vadd.f32 0.0, %v1170
  %v1172 = vpop.f32.mrf.mxu0
  %1173 = vmatprep.mubr.f32.mxu0 0.0
  %1174 = vmatmul.mubr.f32.gmra.mxu0 %v1097
  %v1175 = vpop.f32.mrf.mxu0
  %v1176 = vadd.f32 0.0, %v1175
  %v1177 = vpop.f32.mrf.mxu0
  %1178 = vmatprep.mubr.f32.mxu0 0.0
  %1179 = vmatmul.mubr.f32.gmra.mxu0 %v1098
  %v1180 = vpop.f32.mrf.mxu0
  %v1181 = vadd.f32 0.0, %v1180
  %v1182 = vpop.f32.mrf.mxu0
  %1183 = vdwg.mxu0
  %v1184 = vadd.f32 %v1166, %v1171
  %v1185 = vadd.f32 %v1184, %v1176
  %v1186 = vadd.f32 %v1185, %v1181
  %v1187 = vrot.slane %v1186, 4
  %v1188 = vadd.f32 %v1186, %v1187
  %v1189 = vrot.slane %v1188, 2
  %v1190 = vadd.f32 %v1188, %v1189
  %v1191 = vrot.slane %v1190, 1
  %v1192 = vadd.f32 %v1190, %v1191
  %v1193 = vmul.f32 %v1192, 0.001953125
  %v1194 = vadd.f32 %v1193, 1e-05
  %v1195 = vrsqrt.pop %v1194
  %v1196 = vmul.f32 %v1195, %v647
  %v1197 = vlaneseq
  %v1198 = vshrl.u32 %v1197, 7
  %v1199 = vsub.s32 0, %v1198
  %v1200 = vrot.slane %v1196, %v1199
  %v1201 = vmul.f32 %v1091, %v1200
  %v1202 = vmul.f32 %v1092, %v1200
  %v1203 = vmul.f32 %v1093, %v1200
  %v1204 = vmul.f32 %v1094, %v1200
  %v1206 = vlaneseq
  %v1207 = vshrl.u32 %v1206, 7
  %v1208 = vsub.s32 0, %v1207
  %v1209 = vrot.slane %v648, %v1208
  %v1211 = vadd.f32 %v1201, %v1209
  %v1212 = vadd.f32 %v1202, %v1209
  %v1213 = vadd.f32 %v1203, %v1209
  %v1214 = vadd.f32 %v1204, %v1209
  %1215 = vst [vmem:[%s10] sm:$0xff] %v1211
  %1216 = vst [vmem:[%s10 + $0x8] sm:$0xff] %v1212
  %1217 = vst [vmem:[%s10 + $0x10] sm:$0xff] %v1213
  %1218 = vst [vmem:[%s10 + $0x18] sm:$0xff] %v1214
  // Predicated region
  $region42: #{double_conv_block.1} parent=0 // pred_check
    _
  $region43: #{double_conv_block.1} parent=0 // pred_check_branch
    %1220 = sbr.rel (0) target = $region45
  $region44: #{double_conv_block.1} parent=0 // pred_region
    _
  $region45: #{double_conv_block.1} parent=0 // pred_fallthru
    _
  // Predicated region
  $region46: #{double_conv_block.1} parent=0 // pred_check
    _
  $region47: #{double_conv_block.1} parent=0 // pred_check_branch
    %1222 = sbr.rel (0) target = $region49
  $region48: #{double_conv_block.1} parent=0 // pred_region
    _
  $region49: #{double_conv_block.1} parent=0 // pred_fallthru
    _

</llo_original>
